<compile_context>
chip_gen: v7x
topology: tpu7x:2x2x1
jax: 0.10.0
libtpu: 0.0.40
codegen_flags: <defaults>
</compile_context>

<pallas_src>
import functools

import jax
import jax.numpy as jnp
from jax.experimental import pallas as pl
from jax.experimental.pallas import tpu as pltpu

KH, KW = 3, 3
EPS = 1e-5
# Extra zero rows appended to each flattened strip so the largest tap offset
# (2*Wp + 2) never slices past the block (the extra rows only feed scratch columns).
_ROW_PAD = 8


# ----------------------------- pass 1 kernel ---------------------------------
def _conv_stats_kernel(xs_ref, w_ref, y_ref, stats_ref, *, TH, W, Wp, Cin, Cout):
    """3x3 conv as 9 shifted matmuls + partial InstanceNorm stats for one strip.

    xs_ref   : ((TH+2)*Wp + _ROW_PAD, Cin) f32 reflect-padded strip,
               rows = flattened (padded_row, padded_col), lanes = channels.
    w_ref    : (KH*KW, Cin, Cout) bf16 conv weights, tap-major.
    y_ref    : (TH*Wp, Cout) f32 conv output (cols w in [W, Wp) are scratch).
    stats_ref: (2, Cout) f32 partial [sum, sum_of_squares] over valid positions.
    """
    R = TH * Wp
    x = xs_ref[...]                                   # single hoisted load (f32)
    acc = jnp.zeros((R, Cout), dtype=jnp.float32)
    for kh in range(KH):
        for kw in range(KW):
            shift = kh * Wp + kw
            # Static row-offset slice: output row r = h*Wp + w reads padded
            # position (h+kh, w+kw).  No reshape -> no per-tap relayout.
            xt = x[shift:shift + R, :]
            acc += jnp.dot(xt.astype(jnp.bfloat16),            # bf16 MXU operands
                           w_ref[kh * KW + kw],
                           preferred_element_type=jnp.float32)
    y_ref[...] = acc

    # Partial stats over valid (w < W) positions only; one-pass sum / sum^2.
    row = jax.lax.broadcasted_iota(jnp.int32, (R, 1), 0)
    valid = (row % Wp) < W
    a = jnp.where(valid, acc, 0.0)
    s = jnp.sum(a, axis=0, keepdims=True)
    ss = jnp.sum(a * a, axis=0, keepdims=True)
    stats_ref[...] = jnp.concatenate([s, ss], axis=0)


# ----------------------------- pass 2 kernel ---------------------------------
def _norm_relu_kernel(y_ref, mu_ref, isd_ref, o_ref):
    """Per-(sample, channel) normalize + ReLU over one conv strip."""
    y = y_ref[...]                                     # (R, Cout) f32
    o_ref[...] = jnp.maximum((y - mu_ref[...]) * isd_ref[...], 0.0)


# ------------------------------- wrapper --------------------------------------
def _pick_tile_h(H, Wp, Cin, Cout, budget_bytes=6 << 20):
    """Largest divisor of H whose per-step working set fits a small VMEM budget."""
    for th in range(H, 0, -1):
        if H % th:
            continue
        rows_in = (th + 2) * Wp + _ROW_PAD
        rows_out = th * Wp
        # ~ double-buffered in/out blocks + f32 accumulator (rough estimate).
        per_step = 4 * (2 * rows_in * Cin + 3 * rows_out * Cout)
        if per_step <= budget_bytes:
            return th
    return 1


def generator_conv_block(x_nchw, weight_oihw, bias=None, *, tile_h=None):
    """Conv2d(3x3, stride 1, reflect pad) + InstanceNorm2d + ReLU.

    x_nchw: (N, Cin, H, W) f32.  weight_oihw: (Cout, Cin, 3, 3).  Returns (N, Cout, H, W).
    `bias` is accepted for API parity with nn.Conv2d(bias=True) but intentionally
    unused: InstanceNorm2d(affine=False) cancels a per-channel bias exactly.
    """
    del bias  # exactly cancelled by the InstanceNorm mean subtraction
    N, Cin, H, W = x_nchw.shape
    Cout = weight_oihw.shape[0]
    Hp, Wp = H + KH - 1, W + KW - 1

    TH = tile_h if tile_h is not None else _pick_tile_h(H, Wp, Cin, Cout)
    assert H % TH == 0, "tile_h must divide H"
    nHT = H // TH
    R = TH * Wp
    RS = (TH + 2) * Wp + _ROW_PAD

    # ---- glue: layout, reflect pad, overlapping H-strips (indexing only) ----
    x = jnp.transpose(x_nchw, (0, 2, 3, 1))                       # NHWC
    xp = jnp.pad(x, ((0, 0), (1, 1), (1, 1), (0, 0)), mode="reflect")
    strips = jnp.stack([xp[:, t * TH:t * TH + TH + 2] for t in range(nHT)], axis=1)
    strips = strips.reshape(N, nHT, (TH + 2) * Wp, Cin)
    strips = jnp.pad(strips, ((0, 0), (0, 0), (0, _ROW_PAD), (0, 0)))

    # (Cout, Cin, KH, KW) -> (KH*KW, Cin, Cout), bf16 for native MXU rate.
    w = jnp.transpose(weight_oihw, (2, 3, 1, 0)).reshape(KH * KW, Cin, Cout)
    w = w.astype(jnp.bfloat16)

    # ------------------ pass 1: conv + partial per-strip stats -----------------
    kern1 = functools.partial(_conv_stats_kernel, TH=TH, W=W, Wp=Wp, Cin=Cin, Cout=Cout)
    cost1 = pl.CostEstimate(
        flops=2 * N * H * W * KH * KW * Cin * Cout,
        transcendentals=0,
        bytes_accessed=(4 * N * nHT * RS * Cin + 2 * KH * KW * Cin * Cout
                        + 4 * N * nHT * R * Cout + 4 * N * nHT * 2 * Cout))
    y, stats = pl.pallas_call(
        kern1,
        out_shape=(jax.ShapeDtypeStruct((N, nHT, R, Cout), jnp.float32),
                   jax.ShapeDtypeStruct((N, nHT, 2, Cout), jnp.float32)),
        grid_spec=pltpu.PrefetchScalarGridSpec(
            num_scalar_prefetch=0,
            grid=(N, nHT),
            in_specs=[
                pl.BlockSpec((pl.Squeezed(), pl.Squeezed(), RS, Cin),
                             lambda n, t: (n, t, 0, 0)),
                pl.BlockSpec((KH * KW, Cin, Cout), lambda n, t: (0, 0, 0)),
            ],
            out_specs=[
                pl.BlockSpec((pl.Squeezed(), pl.Squeezed(), R, Cout),
                             lambda n, t: (n, t, 0, 0)),
                pl.BlockSpec((pl.Squeezed(), pl.Squeezed(), 2, Cout),
                             lambda n, t: (n, t, 0, 0)),
            ]),
        compiler_params=pltpu.CompilerParams(
            dimension_semantics=("parallel", "parallel"),
            vmem_limit_bytes=32 * 1024 * 1024),
        cost_estimate=cost1,
    )(strips, w)

    # ---- glue: reduce tiny per-strip partials to per-(sample, channel) stats ----
    tot = jnp.sum(stats, axis=1)                                   # (N, 2, Cout)
    cnt = float(H * W)
    mean = tot[:, 0, :] / cnt
    var = jnp.maximum(tot[:, 1, :] / cnt - mean * mean, 0.0)       # biased variance
    inv_std = jax.lax.rsqrt(var + EPS)
    mu = mean[:, None, :]                                          # (N, 1, Cout)
    isd = inv_std[:, None, :]

    # ------------------ pass 2: normalize + ReLU over the same strips ----------
    cost2 = pl.CostEstimate(
        flops=3 * N * nHT * R * Cout,
        transcendentals=0,
        bytes_accessed=8 * N * nHT * R * Cout + 8 * N * Cout)
    y2 = pl.pallas_call(
        _norm_relu_kernel,
        out_shape=jax.ShapeDtypeStruct((N, nHT, R, Cout), jnp.float32),
        grid_spec=pltpu.PrefetchScalarGridSpec(
            num_scalar_prefetch=0,
            grid=(N, nHT),
            in_specs=[
                pl.BlockSpec((pl.Squeezed(), pl.Squeezed(), R, Cout),
                             lambda n, t: (n, t, 0, 0)),
                pl.BlockSpec((pl.Squeezed(), 1, Cout), lambda n, t: (n, 0, 0)),
                pl.BlockSpec((pl.Squeezed(), 1, Cout), lambda n, t: (n, 0, 0)),
            ],
            out_specs=pl.BlockSpec((pl.Squeezed(), pl.Squeezed(), R, Cout),
                                   lambda n, t: (n, t, 0, 0))),
        compiler_params=pltpu.CompilerParams(
            dimension_semantics=("parallel", "parallel"),
            vmem_limit_bytes=32 * 1024 * 1024),
        cost_estimate=cost2,
    )(y, mu, isd)

    # ---- glue: drop the width-padding scratch columns, back to NCHW ----
    out = y2.reshape(N, nHT, TH, Wp, Cout)[:, :, :, :W, :]
    out = out.reshape(N, H, W, Cout)
    return jnp.transpose(out, (0, 3, 1, 2))


# ------------------------------- reference ------------------------------------
def _reference(x_nchw, weight_oihw, bias):
    """Pure-JAX f32 reference of the PyTorch forward (NCHW, with conv bias)."""
    xp = jnp.pad(x_nchw, ((0, 0), (0, 0), (1, 1), (1, 1)), mode="reflect")
    y = jax.lax.conv_general_dilated(
        xp, weight_oihw, window_strides=(1, 1), padding="VALID",
        dimension_numbers=("NCHW", "OIHW", "NCHW"))
    y = y + bias.reshape(1, -1, 1, 1)
    mean = jnp.mean(y, axis=(2, 3), keepdims=True)
    var = jnp.mean((y - mean) ** 2, axis=(2, 3), keepdims=True)
    y = (y - mean) * jax.lax.rsqrt(var + EPS)
    return jnp.maximum(y, 0.0)


if __name__ == "__main__":
    key = jax.random.PRNGKey(0)
    k_x, k_w, k_b = jax.random.split(key, 3)

    N, Cin, Cout, H, W = 2, 4, 8, 16, 16

    x = jax.random.normal(k_x, (N, Cin, H, W), dtype=jnp.float32)
    fan_in = Cin * KH * KW
    weight = jax.random.normal(k_w, (Cout, Cin, KH, KW), dtype=jnp.float32) / jnp.sqrt(fan_in)
    bias = jax.random.normal(k_b, (Cout,), dtype=jnp.float32) * 0.1

    fwd = jax.jit(functools.partial(generator_conv_block, tile_h=8))
    out = fwd(x, weight, bias)          # tile_h=8 -> 2 H-strips per sample
    out = jax.block_until_ready(out)

    ref = _reference(x, weight, bias)
    assert out.shape == (N, Cout, H, W)
    # bf16 MXU operands -> ~1e-3-level agreement with the pure-f32 reference.
    assert jnp.allclose(out, ref, atol=3e-2, rtol=3e-2), "mismatch vs reference"

    print("KERNEL_OK")
</pallas_src>

<mosaic_0001>
module attributes {stable_mosaic.version = 11 : i64} {
  func.func @_norm_relu_kernel(%arg0: i32, %arg1: i32, %arg2: memref<1x1x144x8xf32, #tpu.memory_space<vmem>>, %arg3: memref<1x1x8xf32, #tpu.memory_space<vmem>>, %arg4: memref<1x1x8xf32, #tpu.memory_space<vmem>>, %arg5: memref<1x1x144x8xf32, #tpu.memory_space<vmem>>) attributes {dimension_semantics = [#tpu.dimension_semantics<parallel>, #tpu.dimension_semantics<parallel>], iteration_bounds = array<i64: 2, 2>, scalar_prefetch = 0 : i64, scratch_operands = 0 : i64, tpu.core_type = #tpu.core_type<tc>, window_params = [{transform_indices = @transform_0, window_bounds = array<i64: 1, 1, 144, 8>}, {transform_indices = @transform_1, window_bounds = array<i64: 1, 1, 8>}, {transform_indices = @transform_2, window_bounds = array<i64: 1, 1, 8>}, {transform_indices = @transform_3, window_bounds = array<i64: 1, 1, 144, 8>}]} {
    %c0 = arith.constant 0 : index
    %c0_0 = arith.constant 0 : index
    %c0_1 = arith.constant 0 : index
    %c0_2 = arith.constant 0 : index
    %0 = vector.load %arg2[%c0, %c0_0, %c0_1, %c0_2] : memref<1x1x144x8xf32, #tpu.memory_space<vmem>>, vector<1x1x144x8xf32>
    %1 = vector.shape_cast %0 : vector<1x1x144x8xf32> to vector<144x8xf32>
    %c0_3 = arith.constant 0 : index
    %c0_4 = arith.constant 0 : index
    %c0_5 = arith.constant 0 : index
    %2 = vector.load %arg3[%c0_3, %c0_4, %c0_5] : memref<1x1x8xf32, #tpu.memory_space<vmem>>, vector<1x1x8xf32>
    %3 = vector.shape_cast %2 : vector<1x1x8xf32> to vector<1x8xf32>
    %4 = vector.broadcast %3 : vector<1x8xf32> to vector<144x8xf32>
    %5 = arith.subf %1, %4 : vector<144x8xf32>
    %c0_6 = arith.constant 0 : index
    %c0_7 = arith.constant 0 : index
    %c0_8 = arith.constant 0 : index
    %6 = vector.load %arg4[%c0_6, %c0_7, %c0_8] : memref<1x1x8xf32, #tpu.memory_space<vmem>>, vector<1x1x8xf32>
    %7 = vector.shape_cast %6 : vector<1x1x8xf32> to vector<1x8xf32>
    %8 = vector.broadcast %7 : vector<1x8xf32> to vector<144x8xf32>
    %9 = arith.mulf %5, %8 : vector<144x8xf32>
    %cst = arith.constant 0.000000e+00 : f32
    %10 = vector.broadcast %cst : f32 to vector<144x8xf32>
    %11 = arith.maximumf %9, %10 : vector<144x8xf32>
    %c0_9 = arith.constant 0 : index
    %c0_10 = arith.constant 0 : index
    %c0_11 = arith.constant 0 : index
    %c0_12 = arith.constant 0 : index
    %12 = vector.load %arg5[%c0_9, %c0_10, %c0_11, %c0_12] : memref<1x1x144x8xf32, #tpu.memory_space<vmem>>, vector<1x1x144x8xf32>
    %13 = vector.shape_cast %12 : vector<1x1x144x8xf32> to vector<144x8xf32>
    %14 = vector.shape_cast %11 : vector<144x8xf32> to vector<1x1x144x8xf32>
    tpu.vector_store %arg5[%c0_9, %c0_10, %c0_11, %c0_12], %14 {strides = array<i32>} : memref<1x1x144x8xf32, #tpu.memory_space<vmem>>, vector<1x1x144x8xf32>,
    return
  }
  func.func @transform_0(%arg0: i32, %arg1: i32) -> (i32, i32, i32, i32) {
    %c0_i32 = arith.constant 0 : i32
    %c0_i32_0 = arith.constant 0 : i32
    %c0_i32_1 = arith.constant 0 : i32
    return %arg0, %arg1, %c0_i32, %c0_i32_0 : i32, i32, i32, i32
  }
  func.func @transform_1(%arg0: i32, %arg1: i32) -> (i32, i32, i32) {
    %c0_i32 = arith.constant 0 : i32
    %c0_i32_0 = arith.constant 0 : i32
    %c0_i32_1 = arith.constant 0 : i32
    return %arg0, %c0_i32, %c0_i32_0 : i32, i32, i32
  }
  func.func @transform_2(%arg0: i32, %arg1: i32) -> (i32, i32, i32) {
    %c0_i32 = arith.constant 0 : i32
    %c0_i32_0 = arith.constant 0 : i32
    %c0_i32_1 = arith.constant 0 : i32
    return %arg0, %c0_i32, %c0_i32_0 : i32, i32, i32
  }
  func.func @transform_3(%arg0: i32, %arg1: i32) -> (i32, i32, i32, i32) {
    %c0_i32 = arith.constant 0 : i32
    %c0_i32_0 = arith.constant 0 : i32
    %c0_i32_1 = arith.constant 0 : i32
    return %arg0, %arg1, %c0_i32, %c0_i32_0 : i32, i32, i32, i32
  }
}

module attributes {stable_mosaic.version = 11 : i64} {
  func.func @_conv_stats_kernel(%arg0: i32, %arg1: i32, %arg2: memref<1x1x188x4xf32, #tpu.memory_space<vmem>>, %arg3: memref<9x4x8xbf16, #tpu.memory_space<vmem>>, %arg4: memref<1x1x144x8xf32, #tpu.memory_space<vmem>>, %arg5: memref<1x1x2x8xf32, #tpu.memory_space<vmem>>) attributes {dimension_semantics = [#tpu.dimension_semantics<parallel>, #tpu.dimension_semantics<parallel>], iteration_bounds = array<i64: 2, 2>, scalar_prefetch = 0 : i64, scratch_operands = 0 : i64, tpu.core_type = #tpu.core_type<tc>, window_params = [{transform_indices = @transform_0, window_bounds = array<i64: 1, 1, 188, 4>}, {pipeline_mode = #tpu.pipeline_mode<synchronous>, transform_indices = @transform_1, window_bounds = array<i64: 9, 4, 8>}, {transform_indices = @transform_2, window_bounds = array<i64: 1, 1, 144, 8>}, {transform_indices = @transform_3, window_bounds = array<i64: 1, 1, 2, 8>}]} {
    %c0 = arith.constant 0 : index
    %c0_0 = arith.constant 0 : index
    %c0_1 = arith.constant 0 : index
    %c0_2 = arith.constant 0 : index
    %0 = vector.load %arg2[%c0, %c0_0, %c0_1, %c0_2] : memref<1x1x188x4xf32, #tpu.memory_space<vmem>>, vector<1x1x188x4xf32>
    %1 = vector.shape_cast %0 : vector<1x1x188x4xf32> to vector<188x4xf32>
    %cst = arith.constant 0.000000e+00 : f32
    %2 = vector.broadcast %cst : f32 to vector<144x8xf32>
    %3 = vector.extract_strided_slice %1 {offsets = [0, 0], sizes = [144, 4], strides = [1, 1]} : vector<188x4xf32> to vector<144x4xf32>
    %4 = arith.truncf %3 : vector<144x4xf32> to vector<144x4xbf16>
    %c0_3 = arith.constant 0 : index
    %c0_4 = arith.constant 0 : index
    %c0_5 = arith.constant 0 : index
    %5 = vector.load %arg3[%c0_3, %c0_4, %c0_5] : memref<9x4x8xbf16, #tpu.memory_space<vmem>>, vector<1x4x8xbf16>
    %6 = vector.shape_cast %5 : vector<1x4x8xbf16> to vector<4x8xbf16>
    %cst_6 = arith.constant dense<0.000000e+00> : vector<144x8xf32>
    %7 = tpu.matmul %4, %6, %cst_6 {dimension_numbers = #tpu.dot_dimension_numbers<[1], [0], [0], [1], [0, 0, 1, 1], [], []>} : vector<144x4xbf16>, vector<4x8xbf16>, vector<144x8xf32> -> vector<144x8xf32>
    %8 = arith.addf %2, %7 : vector<144x8xf32>
    %9 = vector.extract_strided_slice %1 {offsets = [1, 0], sizes = [144, 4], strides = [1, 1]} : vector<188x4xf32> to vector<144x4xf32>
    %10 = arith.truncf %9 : vector<144x4xf32> to vector<144x4xbf16>
    %c1 = arith.constant 1 : index
    %c0_7 = arith.constant 0 : index
    %c0_8 = arith.constant 0 : index
    %11 = vector.load %arg3[%c1, %c0_7, %c0_8] : memref<9x4x8xbf16, #tpu.memory_space<vmem>>, vector<1x4x8xbf16>
    %12 = vector.shape_cast %11 : vector<1x4x8xbf16> to vector<4x8xbf16>
    %cst_9 = arith.constant dense<0.000000e+00> : vector<144x8xf32>
    %13 = tpu.matmul %10, %12, %cst_9 {dimension_numbers = #tpu.dot_dimension_numbers<[1], [0], [0], [1], [0, 0, 1, 1], [], []>} : vector<144x4xbf16>, vector<4x8xbf16>, vector<144x8xf32> -> vector<144x8xf32>
    %14 = arith.addf %8, %13 : vector<144x8xf32>
    %15 = vector.extract_strided_slice %1 {offsets = [2, 0], sizes = [144, 4], strides = [1, 1]} : vector<188x4xf32> to vector<144x4xf32>
    %16 = arith.truncf %15 : vector<144x4xf32> to vector<144x4xbf16>
    %c2 = arith.constant 2 : index
    %c0_10 = arith.constant 0 : index
    %c0_11 = arith.constant 0 : index
    %17 = vector.load %arg3[%c2, %c0_10, %c0_11] : memref<9x4x8xbf16, #tpu.memory_space<vmem>>, vector<1x4x8xbf16>
    %18 = vector.shape_cast %17 : vector<1x4x8xbf16> to vector<4x8xbf16>
    %cst_12 = arith.constant dense<0.000000e+00> : vector<144x8xf32>
    %19 = tpu.matmul %16, %18, %cst_12 {dimension_numbers = #tpu.dot_dimension_numbers<[1], [0], [0], [1], [0, 0, 1, 1], [], []>} : vector<144x4xbf16>, vector<4x8xbf16>, vector<144x8xf32> -> vector<144x8xf32>
    %20 = arith.addf %14, %19 : vector<144x8xf32>
    %21 = vector.extract_strided_slice %1 {offsets = [18, 0], sizes = [144, 4], strides = [1, 1]} : vector<188x4xf32> to vector<144x4xf32>
    %22 = arith.truncf %21 : vector<144x4xf32> to vector<144x4xbf16>
    %c3 = arith.constant 3 : index
    %c0_13 = arith.constant 0 : index
    %c0_14 = arith.constant 0 : index
    %23 = vector.load %arg3[%c3, %c0_13, %c0_14] : memref<9x4x8xbf16, #tpu.memory_space<vmem>>, vector<1x4x8xbf16>
    %24 = vector.shape_cast %23 : vector<1x4x8xbf16> to vector<4x8xbf16>
    %cst_15 = arith.constant dense<0.000000e+00> : vector<144x8xf32>
    %25 = tpu.matmul %22, %24, %cst_15 {dimension_numbers = #tpu.dot_dimension_numbers<[1], [0], [0], [1], [0, 0, 1, 1], [], []>} : vector<144x4xbf16>, vector<4x8xbf16>, vector<144x8xf32> -> vector<144x8xf32>
    %26 = arith.addf %20, %25 : vector<144x8xf32>
    %27 = vector.extract_strided_slice %1 {offsets = [19, 0], sizes = [144, 4], strides = [1, 1]} : vector<188x4xf32> to vector<144x4xf32>
    %28 = arith.truncf %27 : vector<144x4xf32> to vector<144x4xbf16>
    %c4 = arith.constant 4 : index
    %c0_16 = arith.constant 0 : index
    %c0_17 = arith.constant 0 : index
    %29 = vector.load %arg3[%c4, %c0_16, %c0_17] : memref<9x4x8xbf16, #tpu.memory_space<vmem>>, vector<1x4x8xbf16>
    %30 = vector.shape_cast %29 : vector<1x4x8xbf16> to vector<4x8xbf16>
    %cst_18 = arith.constant dense<0.000000e+00> : vector<144x8xf32>
    %31 = tpu.matmul %28, %30, %cst_18 {dimension_numbers = #tpu.dot_dimension_numbers<[1], [0], [0], [1], [0, 0, 1, 1], [], []>} : vector<144x4xbf16>, vector<4x8xbf16>, vector<144x8xf32> -> vector<144x8xf32>
    %32 = arith.addf %26, %31 : vector<144x8xf32>
    %33 = vector.extract_strided_slice %1 {offsets = [20, 0], sizes = [144, 4], strides = [1, 1]} : vector<188x4xf32> to vector<144x4xf32>
    %34 = arith.truncf %33 : vector<144x4xf32> to vector<144x4xbf16>
    %c5 = arith.constant 5 : index
    %c0_19 = arith.constant 0 : index
    %c0_20 = arith.constant 0 : index
    %35 = vector.load %arg3[%c5, %c0_19, %c0_20] : memref<9x4x8xbf16, #tpu.memory_space<vmem>>, vector<1x4x8xbf16>
    %36 = vector.shape_cast %35 : vector<1x4x8xbf16> to vector<4x8xbf16>
    %cst_21 = arith.constant dense<0.000000e+00> : vector<144x8xf32>
    %37 = tpu.matmul %34, %36, %cst_21 {dimension_numbers = #tpu.dot_dimension_numbers<[1], [0], [0], [1], [0, 0, 1, 1], [], []>} : vector<144x4xbf16>, vector<4x8xbf16>, vector<144x8xf32> -> vector<144x8xf32>
    %38 = arith.addf %32, %37 : vector<144x8xf32>
    %39 = vector.extract_strided_slice %1 {offsets = [36, 0], sizes = [144, 4], strides = [1, 1]} : vector<188x4xf32> to vector<144x4xf32>
    %40 = arith.truncf %39 : vector<144x4xf32> to vector<144x4xbf16>
    %c6 = arith.constant 6 : index
    %c0_22 = arith.constant 0 : index
    %c0_23 = arith.constant 0 : index
    %41 = vector.load %arg3[%c6, %c0_22, %c0_23] : memref<9x4x8xbf16, #tpu.memory_space<vmem>>, vector<1x4x8xbf16>
    %42 = vector.shape_cast %41 : vector<1x4x8xbf16> to vector<4x8xbf16>
    %cst_24 = arith.constant dense<0.000000e+00> : vector<144x8xf32>
    %43 = tpu.matmul %40, %42, %cst_24 {dimension_numbers = #tpu.dot_dimension_numbers<[1], [0], [0], [1], [0, 0, 1, 1], [], []>} : vector<144x4xbf16>, vector<4x8xbf16>, vector<144x8xf32> -> vector<144x8xf32>
    %44 = arith.addf %38, %43 : vector<144x8xf32>
    %45 = vector.extract_strided_slice %1 {offsets = [37, 0], sizes = [144, 4], strides = [1, 1]} : vector<188x4xf32> to vector<144x4xf32>
    %46 = arith.truncf %45 : vector<144x4xf32> to vector<144x4xbf16>
    %c7 = arith.constant 7 : index
    %c0_25 = arith.constant 0 : index
    %c0_26 = arith.constant 0 : index
    %47 = vector.load %arg3[%c7, %c0_25, %c0_26] : memref<9x4x8xbf16, #tpu.memory_space<vmem>>, vector<1x4x8xbf16>
    %48 = vector.shape_cast %47 : vector<1x4x8xbf16> to vector<4x8xbf16>
    %cst_27 = arith.constant dense<0.000000e+00> : vector<144x8xf32>
    %49 = tpu.matmul %46, %48, %cst_27 {dimension_numbers = #tpu.dot_dimension_numbers<[1], [0], [0], [1], [0, 0, 1, 1], [], []>} : vector<144x4xbf16>, vector<4x8xbf16>, vector<144x8xf32> -> vector<144x8xf32>
    %50 = arith.addf %44, %49 : vector<144x8xf32>
    %51 = vector.extract_strided_slice %1 {offsets = [38, 0], sizes = [144, 4], strides = [1, 1]} : vector<188x4xf32> to vector<144x4xf32>
    %52 = arith.truncf %51 : vector<144x4xf32> to vector<144x4xbf16>
    %c8 = arith.constant 8 : index
    %c0_28 = arith.constant 0 : index
    %c0_29 = arith.constant 0 : index
    %53 = vector.load %arg3[%c8, %c0_28, %c0_29] : memref<9x4x8xbf16, #tpu.memory_space<vmem>>, vector<1x4x8xbf16>
    %54 = vector.shape_cast %53 : vector<1x4x8xbf16> to vector<4x8xbf16>
    %cst_30 = arith.constant dense<0.000000e+00> : vector<144x8xf32>
    %55 = tpu.matmul %52, %54, %cst_30 {dimension_numbers = #tpu.dot_dimension_numbers<[1], [0], [0], [1], [0, 0, 1, 1], [], []>} : vector<144x4xbf16>, vector<4x8xbf16>, vector<144x8xf32> -> vector<144x8xf32>
    %56 = arith.addf %50, %55 : vector<144x8xf32>
    %c0_31 = arith.constant 0 : index
    %c0_32 = arith.constant 0 : index
    %c0_33 = arith.constant 0 : index
    %c0_34 = arith.constant 0 : index
    %57 = vector.load %arg4[%c0_31, %c0_32, %c0_33, %c0_34] : memref<1x1x144x8xf32, #tpu.memory_space<vmem>>, vector<1x1x144x8xf32>
    %58 = vector.shape_cast %57 : vector<1x1x144x8xf32> to vector<144x8xf32>
    %59 = vector.shape_cast %56 : vector<144x8xf32> to vector<1x1x144x8xf32>
    tpu.vector_store %arg4[%c0_31, %c0_32, %c0_33, %c0_34], %59 {strides = array<i32>} : memref<1x1x144x8xf32, #tpu.memory_space<vmem>>, vector<1x1x144x8xf32>,
    %60 = tpu.iota {dimensions = array<i32: 0>} : vector<144x1xi32>
    %c18_i32 = arith.constant 18 : i32
    %c0_i32 = arith.constant 0 : i32
    %61 = arith.cmpi eq, %c18_i32, %c0_i32 : i32
    %c1_i32 = arith.constant 1 : i32
    %62 = arith.select %61, %c1_i32, %c18_i32 : i32
    %63 = vector.broadcast %62 : i32 to vector<144x1xi32>
    %64 = arith.remsi %60, %63 : vector<144x1xi32>
    %c0_i32_35 = arith.constant 0 : i32
    %65 = vector.broadcast %c0_i32_35 : i32 to vector<144x1xi32>
    %66 = arith.cmpi ne, %64, %65 : vector<144x1xi32>
    %c0_i32_36 = arith.constant 0 : i32
    %67 = vector.broadcast %c0_i32_36 : i32 to vector<144x1xi32>
    %68 = arith.cmpi slt, %64, %67 : vector<144x1xi32>
    %c0_i32_37 = arith.constant 0 : i32
    %69 = arith.cmpi slt, %62, %c0_i32_37 : i32
    %70 = vector.broadcast %69 : i1 to vector<144x1xi1>
    %71 = vector.broadcast %70 : vector<144x1xi1> to vector<144x1xi1>
    %72 = arith.xori %68, %71 : vector<144x1xi1>
    %73 = arith.andi %72, %66 : vector<144x1xi1>
    %74 = vector.broadcast %62 : i32 to vector<144x1xi32>
    %75 = arith.addi %64, %74 : vector<144x1xi32>
    %76 = arith.select %73, %75, %64 : vector<144x1xi1>, vector<144x1xi32>
    %c16_i32 = arith.constant 16 : i32
    %77 = vector.broadcast %c16_i32 : i32 to vector<144x1xi32>
    %78 = arith.cmpi slt, %76, %77 : vector<144x1xi32>
    %cst_38 = arith.constant 0.000000e+00 : f32
    %79 = vector.shape_cast %78 : vector<144x1xi1> to vector<144x1xi1>
    %80 = vector.broadcast %79 : vector<144x1xi1> to vector<144x8xi1>
    %81 = vector.broadcast %cst_38 : f32 to vector<144x8xf32>
    %82 = arith.select %80, %56, %81 : vector<144x8xi1>, vector<144x8xf32>
    %cst_39 = arith.constant dense<0.000000e+00> : vector<8xf32>
    %83 = vector.multi_reduction <add>, %82, %cst_39 [0] : vector<144x8xf32> to vector<8xf32>
    %84 = vector.shape_cast %83 : vector<8xf32> to vector<1x8xf32>
    %85 = arith.mulf %82, %82 : vector<144x8xf32>
    %cst_40 = arith.constant dense<0.000000e+00> : vector<8xf32>
    %86 = vector.multi_reduction <add>, %85, %cst_40 [0] : vector<144x8xf32> to vector<8xf32>
    %87 = vector.shape_cast %86 : vector<8xf32> to vector<1x8xf32>
    %88 = tpu.concatenate %84, %87 in 0 : vector<1x8xf32>, vector<1x8xf32> -> vector<2x8xf32>
    %c0_41 = arith.constant 0 : index
    %c0_42 = arith.constant 0 : index
    %c0_43 = arith.constant 0 : index
    %c0_44 = arith.constant 0 : index
    %89 = vector.load %arg5[%c0_41, %c0_42, %c0_43, %c0_44] : memref<1x1x2x8xf32, #tpu.memory_space<vmem>>, vector<1x1x2x8xf32>
    %90 = vector.shape_cast %89 : vector<1x1x2x8xf32> to vector<2x8xf32>
    %91 = vector.shape_cast %88 : vector<2x8xf32> to vector<1x1x2x8xf32>
    tpu.vector_store %arg5[%c0_41, %c0_42, %c0_43, %c0_44], %91 {strides = array<i32>} : memref<1x1x2x8xf32, #tpu.memory_space<vmem>>, vector<1x1x2x8xf32>,
    return
  }
  func.func @transform_0(%arg0: i32, %arg1: i32) -> (i32, i32, i32, i32) {
    %c0_i32 = arith.constant 0 : i32
    %c0_i32_0 = arith.constant 0 : i32
    %c0_i32_1 = arith.constant 0 : i32
    return %arg0, %arg1, %c0_i32, %c0_i32_0 : i32, i32, i32, i32
  }
  func.func @transform_1(%arg0: i32, %arg1: i32) -> (i32, i32, i32) {
    %c0_i32 = arith.constant 0 : i32
    %c0_i32_0 = arith.constant 0 : i32
    %c0_i32_1 = arith.constant 0 : i32
    %c0_i32_2 = arith.constant 0 : i32
    return %c0_i32, %c0_i32_0, %c0_i32_1 : i32, i32, i32
  }
  func.func @transform_2(%arg0: i32, %arg1: i32) -> (i32, i32, i32, i32) {
    %c0_i32 = arith.constant 0 : i32
    %c0_i32_0 = arith.constant 0 : i32
    %c0_i32_1 = arith.constant 0 : i32
    return %arg0, %arg1, %c0_i32, %c0_i32_0 : i32, i32, i32, i32
  }
  func.func @transform_3(%arg0: i32, %arg1: i32) -> (i32, i32, i32, i32) {
    %c0_i32 = arith.constant 0 : i32
    %c0_i32_0 = arith.constant 0 : i32
    %c0_i32_1 = arith.constant 0 : i32
    return %arg0, %arg1, %c0_i32, %c0_i32_0 : i32, i32, i32, i32
  }
}

</mosaic_0001>

<llo_original>
// kernel: generator_conv_block.3
$region0: #{generator_conv_block.3}
  #allocation0 [shape = 'u32[]', space=smem, size = 0x4, offset = 0x4, fixed_abs, tag = 'smem constant byte address 0x4 - core index']
  #allocation1 [shape = 'u32[144,128]{1,0:T(1,128)}', space=vmem, size = 0x12000, scoped, tag = 'internal scratch']
  %s0 = inlined_call_operand.vmem [shape: f32[2,2,144,8], index: 0, kind: input, shape index: {}]
  %s1 = inlined_call_operand.vmem [shape: f32[2,1,8], index: 1, kind: input, shape index: {}]
  %s2 = inlined_call_operand.vmem [shape: f32[2,1,8], index: 2, kind: input, shape index: {}]
  %s3 = inlined_call_operand.vmem [shape: f32[2,2,144,8], index: 3, kind: output, shape index: {}]
  %s4 = sld [smem:[#allocation0]]
  $region45: #{generator_conv_block.3} parent=0
    _
  %s6 = ssub.s32 1, %s4
  %s7 = scalar_select 0, %s6, %s4
  loop: start=0, step=1, limit=6
  $region2: #{generator_conv_block.3} parent=0 // loop_pre_header
    _
  $region3: #{generator_conv_block.3} parent=0 // loop_header
    %s9 = sphi 0, %s13
    %p10 = scmp.ge.s32.totalorder %s9, 6
    %s16 = sphi 0, %s28
    %s17 = sphi 0, %s24
    %s18 = sphi 0, %s16
    %s19 = sphi 0, %s17
    %s20 = sphi 0, %s18
    %s21 = sphi 0, %s19
    %s33 = sphi 0, %s35
    %s36 = sphi 0, %s33
    %s37 = sphi 0, %s36
    %s53 = sphi 0, %s37
    %s59 = sphi 0, %s61
    %s62 = sphi 0, %s59
    %s63 = sphi 0, %s62
    %s79 = sphi 0, %s63
    %s85 = sphi 0, %s87
    %s88 = sphi 0, %s85
    %s89 = sphi 0, %s88
    %s105 = sphi 0, %s89
    %s113 = sphi 0, %s115
    %s116 = sphi 0, %s113
    %s117 = sphi 0, %s116
    %s133 = sphi 0, %s117
  $region4: #{generator_conv_block.3} parent=0 // loop_header_branch
    %12 = sbr.rel (%p10) target = $region8
  $region5: #{generator_conv_block.3} parent=0 // loop_body
    %s14 = ssub.s32 %s9, 1
    %s15 = ssub.s32 %s9, 2
    %s22 = sadd.s32 1, %s17
    %p23 = scmp.ge.s32.totalorder %s22, 2
    %s24 = scalar_select %p23, 0, %s22
    %s25 = sadd.s32 1, %s16
    %s26 = scalar_select %p23, %s25, %s16
    %p27 = scmp.ge.s32.totalorder %s26, 2
    %s28 = scalar_select %p27, 0, %s26
    %s29 = ssub.s32 %s16, %s28
    %s30 = ssub.s32 %s17, %s24
    %s31 = sor.u32 %s29, %s30
    %p32 = scmp.eq.s32.totalorder %s31, 0
    %s34 = sadd.s32 %s33, 1
    %s35 = scalar_select %p32, %s33, %s34
    %p38 = pneg %p32
    %p39 = scmp.eq.s32.totalorder %s9, 3
    %p40 = por %p38, %p39
    %p41 = scmp.ne.s32.totalorder %s33, %s36
    %p42 = scmp.eq.s32.totalorder %s9, 0
    %p43 = por %p41, %p42
    %p44 = scmp.ne.s32.totalorder %s33, %s36
    %p45 = scmp.eq.s32.totalorder %s14, 3
    %p46 = por %p44, %p45
    %p47 = scmp.ne.s32.totalorder %s36, %s37
    %p48 = scmp.eq.s32.totalorder %s14, 0
    %p49 = por %p47, %p48
    %p50 = scmp.ne.s32.totalorder %s36, %s37
    %p51 = scmp.eq.s32.totalorder %s15, 3
    %p52 = por %p50, %p51
    %p54 = scmp.ne.s32.totalorder %s37, %s53
    %p55 = scmp.eq.s32.totalorder %s15, 0
    %p56 = por %p54, %p55
    %s57 = ssub.s32 %s16, %s28
    %p58 = scmp.eq.s32.totalorder %s57, 0
    %s60 = sadd.s32 %s59, 1
    %s61 = scalar_select %p58, %s59, %s60
    %p64 = pneg %p58
    %p65 = scmp.eq.s32.totalorder %s9, 3
    %p66 = por %p64, %p65
    %p67 = scmp.ne.s32.totalorder %s59, %s62
    %p68 = scmp.eq.s32.totalorder %s9, 0
    %p69 = por %p67, %p68
    %p70 = scmp.ne.s32.totalorder %s59, %s62
    %p71 = scmp.eq.s32.totalorder %s14, 3
    %p72 = por %p70, %p71
    %p73 = scmp.ne.s32.totalorder %s62, %s63
    %p74 = scmp.eq.s32.totalorder %s14, 0
    %p75 = por %p73, %p74
    %p76 = scmp.ne.s32.totalorder %s62, %s63
    %p77 = scmp.eq.s32.totalorder %s15, 3
    %p78 = por %p76, %p77
    %p80 = scmp.ne.s32.totalorder %s63, %s79
    %p81 = scmp.eq.s32.totalorder %s15, 0
    %p82 = por %p80, %p81
    %s83 = ssub.s32 %s16, %s28
    %p84 = scmp.eq.s32.totalorder %s83, 0
    %s86 = sadd.s32 %s85, 1
    %s87 = scalar_select %p84, %s85, %s86
    %p90 = pneg %p84
    %p91 = scmp.eq.s32.totalorder %s9, 3
    %p92 = por %p90, %p91
    %p93 = scmp.ne.s32.totalorder %s85, %s88
    %p94 = scmp.eq.s32.totalorder %s9, 0
    %p95 = por %p93, %p94
    %p96 = scmp.ne.s32.totalorder %s85, %s88
    %p97 = scmp.eq.s32.totalorder %s14, 3
    %p98 = por %p96, %p97
    %p99 = scmp.ne.s32.totalorder %s88, %s89
    %p100 = scmp.eq.s32.totalorder %s14, 0
    %p101 = por %p99, %p100
    %p102 = scmp.ne.s32.totalorder %s88, %s89
    %p103 = scmp.eq.s32.totalorder %s15, 3
    %p104 = por %p102, %p103
    %p106 = scmp.ne.s32.totalorder %s89, %s105
    %p107 = scmp.eq.s32.totalorder %s15, 0
    %p108 = por %p106, %p107
    %s109 = ssub.s32 %s16, %s28
    %s110 = ssub.s32 %s17, %s24
    %s111 = sor.u32 %s109, %s110
    %p112 = scmp.eq.s32.totalorder %s111, 0
    %s114 = sadd.s32 %s113, 1
    %s115 = scalar_select %p112, %s113, %s114
    %p118 = pneg %p112
    %p119 = scmp.eq.s32.totalorder %s9, 3
    %p120 = por %p118, %p119
    %p121 = scmp.ne.s32.totalorder %s113, %s116
    %p122 = scmp.eq.s32.totalorder %s9, 0
    %p123 = por %p121, %p122
    %p124 = scmp.ne.s32.totalorder %s113, %s116
    %p125 = scmp.eq.s32.totalorder %s14, 3
    %p126 = por %p124, %p125
    %p127 = scmp.ne.s32.totalorder %s116, %s117
    %p128 = scmp.eq.s32.totalorder %s14, 0
    %p129 = por %p127, %p128
    %p130 = scmp.ne.s32.totalorder %s116, %s117
    %p131 = scmp.eq.s32.totalorder %s15, 3
    %p132 = por %p130, %p131
    %p134 = scmp.ne.s32.totalorder %s117, %s133
    %p135 = scmp.eq.s32.totalorder %s15, 0
    %p136 = por %p134, %p135
    %p137 = scmp.le.s32.totalorder 1, %s9
    %p138 = scmp.lt.s32.totalorder %s9, 5
    %p139 = pnand %p137, %p138
    %p140 = pneg %p139
    // Predicated region
    $region9: #{generator_conv_block.3} parent=5 // pred_check
      _
    $region10: #{generator_conv_block.3} parent=5 // pred_check_branch
      %142 = sbr.rel (%p139) target = $region12
    $region11: #{generator_conv_block.3} parent=5 // pred_region
      %s143 = ssub.s32 %s9, 1
    $region12: #{generator_conv_block.3} parent=5 // pred_fallthru
      _
    %p144 = scmp.lt.s32.totalorder %s9, 4
    // Predicated region
    $region13: #{generator_conv_block.3} parent=5 // pred_check
      %p145 = pneg %p144
    $region14: #{generator_conv_block.3} parent=5 // pred_check_branch
      %147 = sbr.rel (%p145) target = $region16
    $region15: #{generator_conv_block.3} parent=5 // pred_region
      // Predicated region
      $region17: #{generator_conv_block.3} parent=15 // pred_check
        %p148 = pneg %p43
      $region18: #{generator_conv_block.3} parent=15 // pred_check_branch
        %150 = sbr.rel (%p148) target = $region20
      $region19: #{generator_conv_block.3} parent=15 // pred_region
        %p151 = scmp.lt.s32.totalorder %s16, 1
        %s152 = scalar_select %p151, %s16, 1
        %p153 = scmp.lt.s32.totalorder %s17, 1
        %s154 = scalar_select %p153, %s17, 1
        %s155 = smul.addr %s154, 18
        %s156 = smul.addr %s152, 36
        %s157 = sadd.s32 %s155, %s156
        %s158 = smul.addr %s157, 8
        %s159 = scalar_lea.vmem %s0, %s158
      $region20: #{generator_conv_block.3} parent=15 // pred_fallthru
        _
      // Predicated region
      $region21: #{generator_conv_block.3} parent=15 // pred_check
        %p160 = pneg %p69
      $region22: #{generator_conv_block.3} parent=15 // pred_check_branch
        %162 = sbr.rel (%p160) target = $region24
      $region23: #{generator_conv_block.3} parent=15 // pred_region
        %p163 = scmp.lt.s32.totalorder %s16, 1
        %s164 = scalar_select %p163, %s16, 1
        %s165 = scalar_lea.vmem %s1, %s164
      $region24: #{generator_conv_block.3} parent=15 // pred_fallthru
        _
      // Predicated region
      $region25: #{generator_conv_block.3} parent=15 // pred_check
        %p166 = pneg %p95
      $region26: #{generator_conv_block.3} parent=15 // pred_check_branch
        %168 = sbr.rel (%p166) target = $region28
      $region27: #{generator_conv_block.3} parent=15 // pred_region
        %p169 = scmp.lt.s32.totalorder %s16, 1
        %s170 = scalar_select %p169, %s16, 1
        %s171 = scalar_lea.vmem %s2, %s170
      $region28: #{generator_conv_block.3} parent=15 // pred_fallthru
        _
    $region16: #{generator_conv_block.3} parent=5 // pred_fallthru
      _
    %p172 = scmp.le.s32.totalorder 1, %s9
    %p173 = scmp.lt.s32.totalorder %s9, 5
    %p174 = pnand %p172, %p173
    %p175 = pneg %p174
    // Predicated region
    $region29: #{generator_conv_block.3} parent=5 // pred_check
      _
    $region30: #{generator_conv_block.3} parent=5 // pred_check_branch
      %177 = sbr.rel (%p174) target = $region32
    $region31: #{generator_conv_block.3} parent=5 // pred_region
      %s178 = ssub.s32 %s9, 1
      %p179 = scmp.lt.s32.totalorder %s18, 1
      %s180 = scalar_select %p179, %s18, 1
      %p181 = scmp.lt.s32.totalorder %s19, 1
      %s182 = scalar_select %p181, %s19, 1
      %s183 = smul.addr %s182, 18
      %s184 = smul.addr %s180, 36
      %s185 = sadd.s32 %s183, %s184
      %s186 = smul.addr %s185, 8
      %s187 = scalar_lea.vmem %s0, %s186
      %p188 = pneg %p49
      %p189 = pneg %p46
      %p190 = scmp.lt.s32.totalorder %s18, 1
      %s191 = scalar_select %p190, %s18, 1
      %s192 = scalar_lea.vmem %s1, %s191
      %p193 = pneg %p75
      %p194 = pneg %p72
      %p195 = scmp.lt.s32.totalorder %s18, 1
      %s196 = scalar_select %p195, %s18, 1
      %s197 = scalar_lea.vmem %s2, %s196
      %p198 = pneg %p101
      %p199 = pneg %p98
      %p200 = pneg %p129
      %p201 = pneg %p126
      %p202 = scmp.lt.s32.totalorder %s18, 1
      %s203 = scalar_select %p202, %s18, 1
      %p204 = scmp.lt.s32.totalorder %s19, 1
      %s205 = scalar_select %p204, %s19, 1
      %s206 = smul.addr %s205, 18
      %s207 = smul.addr %s203, 36
      %s208 = sadd.s32 %s206, %s207
      %s209 = smul.addr %s208, 8
      %s210 = scalar_lea.vmem %s3, %s209
      %p211 = scmp.lt.s32.totalorder %s18, 1
      %s212 = scalar_select %p211, %s18, 1
      %p213 = scmp.lt.s32.totalorder %s19, 1
      %s214 = scalar_select %p213, %s19, 1
      %s215 = smul.addr %s214, 18
      %s216 = smul.addr %s212, 36
      %s217 = sadd.s32 %s215, %s216
      %s218 = smul.addr %s217, 8
      %s219 = scalar_lea.vmem %s0, %s218
      %p220 = scmp.lt.s32.totalorder %s18, 1
      %s221 = scalar_select %p220, %s18, 1
      %s222 = scalar_lea.vmem %s1, %s221
      %p223 = scmp.lt.s32.totalorder %s18, 1
      %s224 = scalar_select %p223, %s18, 1
      %s225 = scalar_lea.vmem %s2, %s224
      %p226 = scmp.lt.s32.totalorder %s18, 1
      %s227 = scalar_select %p226, %s18, 1
      %p228 = scmp.lt.s32.totalorder %s19, 1
      %s229 = scalar_select %p228, %s19, 1
      %s230 = smul.addr %s229, 18
      %s231 = smul.addr %s227, 36
      %s232 = sadd.s32 %s230, %s231
      %s233 = smul.addr %s232, 8
      %s234 = scalar_lea.vmem %s3, %s233
      %v235 = vld [vmem:[%s219] sm:$0xff]
      %v236 = vld [vmem:[%s219 + $0x8] sm:$0xff]
      %v237 = vld [vmem:[%s219 + $0x10] sm:$0xff]
      %v238 = vld [vmem:[%s219 + $0x18] sm:$0xff]
      %v239 = vld [vmem:[%s219 + $0x20] sm:$0xff]
      %v240 = vld [vmem:[%s219 + $0x28] sm:$0xff]
      %v241 = vld [vmem:[%s219 + $0x30] sm:$0xff]
      %v242 = vld [vmem:[%s219 + $0x38] sm:$0xff]
      %v243 = vld [vmem:[%s219 + $0x40] sm:$0xff]
      %v244 = vld [vmem:[%s219 + $0x48] sm:$0xff]
      %v245 = vld [vmem:[%s219 + $0x50] sm:$0xff]
      %v246 = vld [vmem:[%s219 + $0x58] sm:$0xff]
      %v247 = vld [vmem:[%s219 + $0x60] sm:$0xff]
      %v248 = vld [vmem:[%s219 + $0x68] sm:$0xff]
      %v249 = vld [vmem:[%s219 + $0x70] sm:$0xff]
      %v250 = vld [vmem:[%s219 + $0x78] sm:$0xff]
      %v251 = vld [vmem:[%s219 + $0x80] sm:$0xff]
      %v252 = vld [vmem:[%s219 + $0x88] sm:$0xff]
      %v253 = vld [vmem:[%s222] sm:$0x1]
      %v255 = vlaneseq
      %v256 = vshrl.u32 %v255, 7
      %v257 = vsub.s32 0, %v256
      %v258 = vrot.slane %v253, %v257
      %v260 = vsub.f32 %v235, %v258
      %v261 = vsub.f32 %v236, %v258
      %v262 = vsub.f32 %v237, %v258
      %v263 = vsub.f32 %v238, %v258
      %v264 = vsub.f32 %v239, %v258
      %v265 = vsub.f32 %v240, %v258
      %v266 = vsub.f32 %v241, %v258
      %v267 = vsub.f32 %v242, %v258
      %v268 = vsub.f32 %v243, %v258
      %v269 = vsub.f32 %v244, %v258
      %v270 = vsub.f32 %v245, %v258
      %v271 = vsub.f32 %v246, %v258
      %v272 = vsub.f32 %v247, %v258
      %v273 = vsub.f32 %v248, %v258
      %v274 = vsub.f32 %v249, %v258
      %v275 = vsub.f32 %v250, %v258
      %v276 = vsub.f32 %v251, %v258
      %v277 = vsub.f32 %v252, %v258
      %v278 = vld [vmem:[%s225] sm:$0x1]
      %v280 = vlaneseq
      %v281 = vshrl.u32 %v280, 7
      %v282 = vsub.s32 0, %v281
      %v283 = vrot.slane %v278, %v282
      %v285 = vmul.f32 %v260, %v283
      %v286 = vmul.f32 %v261, %v283
      %v287 = vmul.f32 %v262, %v283
      %v288 = vmul.f32 %v263, %v283
      %v289 = vmul.f32 %v264, %v283
      %v290 = vmul.f32 %v265, %v283
      %v291 = vmul.f32 %v266, %v283
      %v292 = vmul.f32 %v267, %v283
      %v293 = vmul.f32 %v268, %v283
      %v294 = vmul.f32 %v269, %v283
      %v295 = vmul.f32 %v270, %v283
      %v296 = vmul.f32 %v271, %v283
      %v297 = vmul.f32 %v272, %v283
      %v298 = vmul.f32 %v273, %v283
      %v299 = vmul.f32 %v274, %v283
      %v300 = vmul.f32 %v275, %v283
      %v301 = vmul.f32 %v276, %v283
      %v302 = vmul.f32 %v277, %v283
      %v303 = vmax.f32 %v285, 0.0
      %v304 = vmax.f32 %v286, 0.0
      %v305 = vmax.f32 %v287, 0.0
      %v306 = vmax.f32 %v288, 0.0
      %v307 = vmax.f32 %v289, 0.0
      %v308 = vmax.f32 %v290, 0.0
      %v309 = vmax.f32 %v291, 0.0
      %v310 = vmax.f32 %v292, 0.0
      %v311 = vmax.f32 %v293, 0.0
      %v312 = vmax.f32 %v294, 0.0
      %v313 = vmax.f32 %v295, 0.0
      %v314 = vmax.f32 %v296, 0.0
      %v315 = vmax.f32 %v297, 0.0
      %v316 = vmax.f32 %v298, 0.0
      %v317 = vmax.f32 %v299, 0.0
      %v318 = vmax.f32 %v300, 0.0
      %v319 = vmax.f32 %v301, 0.0
      %v320 = vmax.f32 %v302, 0.0
      %vm321 = vcmask 64512
      %322 = vst.msk [vmem:[%s234] sm:$0xff] %vm321, %v303
      %323 = vst.msk [vmem:[%s234 + $0x8] sm:$0xff] %vm321, %v304
      %324 = vst.msk [vmem:[%s234 + $0x10] sm:$0xff] %vm321, %v305
      %325 = vst.msk [vmem:[%s234 + $0x18] sm:$0xff] %vm321, %v306
      %326 = vst.msk [vmem:[%s234 + $0x20] sm:$0xff] %vm321, %v307
      %327 = vst.msk [vmem:[%s234 + $0x28] sm:$0xff] %vm321, %v308
      %328 = vst.msk [vmem:[%s234 + $0x30] sm:$0xff] %vm321, %v309
      %329 = vst.msk [vmem:[%s234 + $0x38] sm:$0xff] %vm321, %v310
      %330 = vst.msk [vmem:[%s234 + $0x40] sm:$0xff] %vm321, %v311
      %331 = vst.msk [vmem:[%s234 + $0x48] sm:$0xff] %vm321, %v312
      %332 = vst.msk [vmem:[%s234 + $0x50] sm:$0xff] %vm321, %v313
      %333 = vst.msk [vmem:[%s234 + $0x58] sm:$0xff] %vm321, %v314
      %334 = vst.msk [vmem:[%s234 + $0x60] sm:$0xff] %vm321, %v315
      %335 = vst.msk [vmem:[%s234 + $0x68] sm:$0xff] %vm321, %v316
      %336 = vst.msk [vmem:[%s234 + $0x70] sm:$0xff] %vm321, %v317
      %337 = vst.msk [vmem:[%s234 + $0x78] sm:$0xff] %vm321, %v318
      %338 = vst.msk [vmem:[%s234 + $0x80] sm:$0xff] %vm321, %v319
      %339 = vst.msk [vmem:[%s234 + $0x88] sm:$0xff] %vm321, %v320
      %p340 = scmp.lt.s32.totalorder %s18, 1
      %s341 = scalar_select %p340, %s18, 1
      %p342 = scmp.lt.s32.totalorder %s19, 1
      %s343 = scalar_select %p342, %s19, 1
      %s344 = smul.addr %s343, 18
      %s345 = smul.addr %s341, 36
      %s346 = sadd.s32 %s344, %s345
      %s347 = smul.addr %s346, 8
      %s348 = scalar_lea.vmem %s3, %s347
      // Predicated region
      $region33: #{generator_conv_block.3} parent=31 // pred_check
        %p349 = pneg %p126
      $region34: #{generator_conv_block.3} parent=31 // pred_check_branch
        %351 = sbr.rel (%p349) target = $region36
      $region35: #{generator_conv_block.3} parent=31 // pred_region
        _
      $region36: #{generator_conv_block.3} parent=31 // pred_fallthru
        _
    $region32: #{generator_conv_block.3} parent=5 // pred_fallthru
      _
    %p352 = scmp.le.s32.totalorder 2, %s9
    // Predicated region
    $region37: #{generator_conv_block.3} parent=5 // pred_check
      %p353 = pneg %p352
    $region38: #{generator_conv_block.3} parent=5 // pred_check_branch
      %355 = sbr.rel (%p353) target = $region40
    $region39: #{generator_conv_block.3} parent=5 // pred_region
      %s356 = ssub.s32 %s9, 2
      // Predicated region
      $region41: #{generator_conv_block.3} parent=39 // pred_check
        %p357 = pneg %p132
      $region42: #{generator_conv_block.3} parent=39 // pred_check_branch
        %359 = sbr.rel (%p357) target = $region44
      $region43: #{generator_conv_block.3} parent=39 // pred_region
        %p360 = scmp.lt.s32.totalorder %s20, 1
        %s361 = scalar_select %p360, %s20, 1
        %p362 = scmp.lt.s32.totalorder %s21, 1
        %s363 = scalar_select %p362, %s21, 1
        %s364 = smul.addr %s363, 18
        %s365 = smul.addr %s361, 36
        %s366 = sadd.s32 %s364, %s365
        %s367 = smul.addr %s366, 8
        %s368 = scalar_lea.vmem %s3, %s367
      $region44: #{generator_conv_block.3} parent=39 // pred_fallthru
        _
    $region40: #{generator_conv_block.3} parent=5 // pred_fallthru
      _
  $region6: #{generator_conv_block.3} parent=0 // loop_footer
    %s13 = sadd.s32 1, %s9
  $region7: #{generator_conv_block.3} parent=0 // loop_footer_branch
    %8 = sbr.rel target = $region3
  $region8: #{generator_conv_block.3} parent=0 // loop_exit
    _

// kernel: generator_conv_block.2
$region0: #{generator_conv_block.2}
  #allocation0 [shape = 'u32[]', space=smem, size = 0x4, offset = 0x4, fixed_abs, tag = 'smem constant byte address 0x4 - core index']
  #allocation1 [shape = 'u32[144,128]{1,0:T(1,128)}', space=vmem, size = 0x12000, scoped, tag = 'internal scratch']
  %s0 = inlined_call_operand.vmem [shape: f32[2,2,188,4], index: 0, kind: input, shape index: {}]
  %s1 = inlined_call_operand.vmem [shape: bf16[9,4,8], index: 1, kind: input, shape index: {}]
  %s2 = inlined_call_operand.vmem [shape: f32[2,2,144,8], index: 2, kind: output, shape index: {0}]
  %s3 = inlined_call_operand.vmem [shape: f32[2,2,2,8], index: 3, kind: output, shape index: {1}]
  %4 = xla_tuple %s2, %s3
  %s5 = sld [smem:[#allocation0]]
  $region49: #{generator_conv_block.2} parent=0
    _
  %s7 = ssub.s32 1, %s5
  %s8 = scalar_select 0, %s7, %s5
  loop: start=0, step=1, limit=6
  $region2: #{generator_conv_block.2} parent=0 // loop_pre_header
    _
  $region3: #{generator_conv_block.2} parent=0 // loop_header
    %s10 = sphi 0, %s14
    %p11 = scmp.ge.s32.totalorder %s10, 6
    %s17 = sphi 0, %s29
    %s18 = sphi 0, %s25
    %s19 = sphi 0, %s17
    %s20 = sphi 0, %s18
    %s21 = sphi 0, %s19
    %s22 = sphi 0, %s20
    %s34 = sphi 0, %s36
    %s37 = sphi 0, %s34
    %s38 = sphi 0, %s37
    %s54 = sphi 0, %s38
    %s58 = sphi 0, %s58
    %s60 = sphi 0, %s58
    %s61 = sphi 0, %s60
    %s75 = sphi 0, %s61
    %s83 = sphi 0, %s85
    %s86 = sphi 0, %s83
    %s87 = sphi 0, %s86
    %s103 = sphi 0, %s87
    %s111 = sphi 0, %s113
    %s114 = sphi 0, %s111
    %s115 = sphi 0, %s114
    %s131 = sphi 0, %s115
  $region4: #{generator_conv_block.2} parent=0 // loop_header_branch
    %13 = sbr.rel (%p11) target = $region8
  $region5: #{generator_conv_block.2} parent=0 // loop_body
    %s15 = ssub.s32 %s10, 1
    %s16 = ssub.s32 %s10, 2
    %s23 = sadd.s32 1, %s18
    %p24 = scmp.ge.s32.totalorder %s23, 2
    %s25 = scalar_select %p24, 0, %s23
    %s26 = sadd.s32 1, %s17
    %s27 = scalar_select %p24, %s26, %s17
    %p28 = scmp.ge.s32.totalorder %s27, 2
    %s29 = scalar_select %p28, 0, %s27
    %s30 = ssub.s32 %s17, %s29
    %s31 = ssub.s32 %s18, %s25
    %s32 = sor.u32 %s30, %s31
    %p33 = scmp.eq.s32.totalorder %s32, 0
    %s35 = sadd.s32 %s34, 1
    %s36 = scalar_select %p33, %s34, %s35
    %p39 = pneg %p33
    %p40 = scmp.eq.s32.totalorder %s10, 3
    %p41 = por %p39, %p40
    %p42 = scmp.ne.s32.totalorder %s34, %s37
    %p43 = scmp.eq.s32.totalorder %s10, 0
    %p44 = por %p42, %p43
    %p45 = scmp.ne.s32.totalorder %s34, %s37
    %p46 = scmp.eq.s32.totalorder %s15, 3
    %p47 = por %p45, %p46
    %p48 = scmp.ne.s32.totalorder %s37, %s38
    %p49 = scmp.eq.s32.totalorder %s15, 0
    %p50 = por %p48, %p49
    %p51 = scmp.ne.s32.totalorder %s37, %s38
    %p52 = scmp.eq.s32.totalorder %s16, 3
    %p53 = por %p51, %p52
    %p55 = scmp.ne.s32.totalorder %s38, %s54
    %p56 = scmp.eq.s32.totalorder %s16, 0
    %p57 = por %p55, %p56
    %s59 = sadd.s32 %s58, 1
    %p62 = scmp.eq.s32.totalorder %s10, 3
    %p63 = scmp.ne.s32.totalorder %s58, %s60
    %p64 = scmp.eq.s32.totalorder %s10, 0
    %p65 = por %p63, %p64
    %p66 = scmp.ne.s32.totalorder %s58, %s60
    %p67 = scmp.eq.s32.totalorder %s15, 3
    %p68 = por %p66, %p67
    %p69 = scmp.ne.s32.totalorder %s60, %s61
    %p70 = scmp.eq.s32.totalorder %s15, 0
    %p71 = por %p69, %p70
    %p72 = scmp.ne.s32.totalorder %s60, %s61
    %p73 = scmp.eq.s32.totalorder %s16, 3
    %p74 = por %p72, %p73
    %p76 = scmp.ne.s32.totalorder %s61, %s75
    %p77 = scmp.eq.s32.totalorder %s16, 0
    %p78 = por %p76, %p77
    %s79 = ssub.s32 %s17, %s29
    %s80 = ssub.s32 %s18, %s25
    %s81 = sor.u32 %s79, %s80
    %p82 = scmp.eq.s32.totalorder %s81, 0
    %s84 = sadd.s32 %s83, 1
    %s85 = scalar_select %p82, %s83, %s84
    %p88 = pneg %p82
    %p89 = scmp.eq.s32.totalorder %s10, 3
    %p90 = por %p88, %p89
    %p91 = scmp.ne.s32.totalorder %s83, %s86
    %p92 = scmp.eq.s32.totalorder %s10, 0
    %p93 = por %p91, %p92
    %p94 = scmp.ne.s32.totalorder %s83, %s86
    %p95 = scmp.eq.s32.totalorder %s15, 3
    %p96 = por %p94, %p95
    %p97 = scmp.ne.s32.totalorder %s86, %s87
    %p98 = scmp.eq.s32.totalorder %s15, 0
    %p99 = por %p97, %p98
    %p100 = scmp.ne.s32.totalorder %s86, %s87
    %p101 = scmp.eq.s32.totalorder %s16, 3
    %p102 = por %p100, %p101
    %p104 = scmp.ne.s32.totalorder %s87, %s103
    %p105 = scmp.eq.s32.totalorder %s16, 0
    %p106 = por %p104, %p105
    %s107 = ssub.s32 %s17, %s29
    %s108 = ssub.s32 %s18, %s25
    %s109 = sor.u32 %s107, %s108
    %p110 = scmp.eq.s32.totalorder %s109, 0
    %s112 = sadd.s32 %s111, 1
    %s113 = scalar_select %p110, %s111, %s112
    %p116 = pneg %p110
    %p117 = scmp.eq.s32.totalorder %s10, 3
    %p118 = por %p116, %p117
    %p119 = scmp.ne.s32.totalorder %s111, %s114
    %p120 = scmp.eq.s32.totalorder %s10, 0
    %p121 = por %p119, %p120
    %p122 = scmp.ne.s32.totalorder %s111, %s114
    %p123 = scmp.eq.s32.totalorder %s15, 3
    %p124 = por %p122, %p123
    %p125 = scmp.ne.s32.totalorder %s114, %s115
    %p126 = scmp.eq.s32.totalorder %s15, 0
    %p127 = por %p125, %p126
    %p128 = scmp.ne.s32.totalorder %s114, %s115
    %p129 = scmp.eq.s32.totalorder %s16, 3
    %p130 = por %p128, %p129
    %p132 = scmp.ne.s32.totalorder %s115, %s131
    %p133 = scmp.eq.s32.totalorder %s16, 0
    %p134 = por %p132, %p133
    %p135 = scmp.le.s32.totalorder 1, %s10
    %p136 = scmp.lt.s32.totalorder %s10, 5
    %p137 = pnand %p135, %p136
    %p138 = pneg %p137
    // Predicated region
    $region9: #{generator_conv_block.2} parent=5 // pred_check
      _
    $region10: #{generator_conv_block.2} parent=5 // pred_check_branch
      %140 = sbr.rel (%p137) target = $region12
    $region11: #{generator_conv_block.2} parent=5 // pred_region
      %s141 = ssub.s32 %s10, 1
      // Predicated region
      $region13: #{generator_conv_block.2} parent=11 // pred_check
        %p142 = pneg %p71
      $region14: #{generator_conv_block.2} parent=11 // pred_check_branch
        %144 = sbr.rel (%p142) target = $region16
      $region15: #{generator_conv_block.2} parent=11 // pred_region
        _
      $region16: #{generator_conv_block.2} parent=11 // pred_fallthru
        _
    $region12: #{generator_conv_block.2} parent=5 // pred_fallthru
      _
    %p145 = scmp.lt.s32.totalorder %s10, 4
    // Predicated region
    $region17: #{generator_conv_block.2} parent=5 // pred_check
      %p146 = pneg %p145
    $region18: #{generator_conv_block.2} parent=5 // pred_check_branch
      %148 = sbr.rel (%p146) target = $region20
    $region19: #{generator_conv_block.2} parent=5 // pred_region
      // Predicated region
      $region21: #{generator_conv_block.2} parent=19 // pred_check
        %p149 = pneg %p44
      $region22: #{generator_conv_block.2} parent=19 // pred_check_branch
        %151 = sbr.rel (%p149) target = $region24
      $region23: #{generator_conv_block.2} parent=19 // pred_region
        %p152 = scmp.lt.s32.totalorder %s17, 1
        %s153 = scalar_select %p152, %s17, 1
        %p154 = scmp.lt.s32.totalorder %s18, 1
        %s155 = scalar_select %p154, %s18, 1
        %s156 = smul.addr %s155, 24
        %s157 = smul.addr %s153, 48
        %s158 = sadd.s32 %s156, %s157
        %s159 = smul.addr %s158, 8
        %s160 = scalar_lea.vmem %s0, %s159
      $region24: #{generator_conv_block.2} parent=19 // pred_fallthru
        _
    $region20: #{generator_conv_block.2} parent=5 // pred_fallthru
      _
    %p161 = scmp.le.s32.totalorder 1, %s10
    %p162 = scmp.lt.s32.totalorder %s10, 5
    %p163 = pnand %p161, %p162
    %p164 = pneg %p163
    // Predicated region
    $region25: #{generator_conv_block.2} parent=5 // pred_check
      _
    $region26: #{generator_conv_block.2} parent=5 // pred_check_branch
      %166 = sbr.rel (%p163) target = $region28
    $region27: #{generator_conv_block.2} parent=5 // pred_region
      %s167 = ssub.s32 %s10, 1
      %p168 = scmp.lt.s32.totalorder %s19, 1
      %s169 = scalar_select %p168, %s19, 1
      %p170 = scmp.lt.s32.totalorder %s20, 1
      %s171 = scalar_select %p170, %s20, 1
      %s172 = smul.addr %s171, 24
      %s173 = smul.addr %s169, 48
      %s174 = sadd.s32 %s172, %s173
      %s175 = smul.addr %s174, 8
      %s176 = scalar_lea.vmem %s0, %s175
      %p177 = pneg %p50
      %p178 = pneg %p47
      %p179 = pneg %p71
      %p180 = pneg %p68
      %p181 = pneg %p99
      %p182 = pneg %p96
      %p183 = scmp.lt.s32.totalorder %s19, 1
      %s184 = scalar_select %p183, %s19, 1
      %p185 = scmp.lt.s32.totalorder %s20, 1
      %s186 = scalar_select %p185, %s20, 1
      %s187 = smul.addr %s186, 18
      %s188 = smul.addr %s184, 36
      %s189 = sadd.s32 %s187, %s188
      %s190 = smul.addr %s189, 8
      %s191 = scalar_lea.vmem %s2, %s190
      %p192 = pneg %p127
      %p193 = pneg %p124
      %p194 = scmp.lt.s32.totalorder %s19, 1
      %s195 = scalar_select %p194, %s19, 1
      %p196 = scmp.lt.s32.totalorder %s20, 1
      %s197 = scalar_select %p196, %s20, 1
      %s198 = smul.addr %s195, 2
      %s199 = sadd.s32 %s197, %s198
      %s200 = smul.addr %s199, 2
      %s201 = scalar_lea.vmem %s3, %s200
      %p202 = scmp.lt.s32.totalorder %s19, 1
      %s203 = scalar_select %p202, %s19, 1
      %p204 = scmp.lt.s32.totalorder %s20, 1
      %s205 = scalar_select %p204, %s20, 1
      %s206 = smul.addr %s205, 24
      %s207 = smul.addr %s203, 48
      %s208 = sadd.s32 %s206, %s207
      %s209 = smul.addr %s208, 8
      %s210 = scalar_lea.vmem %s0, %s209
      %p211 = scmp.lt.s32.totalorder %s19, 1
      %s212 = scalar_select %p211, %s19, 1
      %p213 = scmp.lt.s32.totalorder %s20, 1
      %s214 = scalar_select %p213, %s20, 1
      %s215 = smul.addr %s214, 18
      %s216 = smul.addr %s212, 36
      %s217 = sadd.s32 %s215, %s216
      %s218 = smul.addr %s217, 8
      %s219 = scalar_lea.vmem %s2, %s218
      %p220 = scmp.lt.s32.totalorder %s19, 1
      %s221 = scalar_select %p220, %s19, 1
      %p222 = scmp.lt.s32.totalorder %s20, 1
      %s223 = scalar_select %p222, %s20, 1
      %s224 = smul.addr %s221, 2
      %s225 = sadd.s32 %s223, %s224
      %s226 = smul.addr %s225, 2
      %s227 = scalar_lea.vmem %s3, %s226
      %v229 = vld [vmem:[%s210] sm:$0xff]
      %v230 = vld [vmem:[%s210 + $0x8] sm:$0xff]
      %v231 = vld [vmem:[%s210 + $0x10] sm:$0xff]
      %v232 = vld [vmem:[%s210 + $0x18] sm:$0xff]
      %v233 = vld [vmem:[%s210 + $0x20] sm:$0xff]
      %v234 = vld [vmem:[%s210 + $0x28] sm:$0xff]
      %v235 = vld [vmem:[%s210 + $0x30] sm:$0xff]
      %v236 = vld [vmem:[%s210 + $0x38] sm:$0xff]
      %v237 = vld [vmem:[%s210 + $0x40] sm:$0xff]
      %v238 = vld [vmem:[%s210 + $0x48] sm:$0xff]
      %v239 = vld [vmem:[%s210 + $0x50] sm:$0xff]
      %v240 = vld [vmem:[%s210 + $0x58] sm:$0xff]
      %v241 = vld [vmem:[%s210 + $0x60] sm:$0xff]
      %v242 = vld [vmem:[%s210 + $0x68] sm:$0xff]
      %v243 = vld [vmem:[%s210 + $0x70] sm:$0xff]
      %v244 = vld [vmem:[%s210 + $0x78] sm:$0xff]
      %v245 = vld [vmem:[%s210 + $0x80] sm:$0xff]
      %v246 = vld [vmem:[%s210 + $0x88] sm:$0xff]
      %v247 = vld [vmem:[%s210 + $0x90] sm:$0xff]
      %v248 = vld [vmem:[%s210 + $0x98] sm:$0xff]
      %v249 = vld [vmem:[%s210 + $0xa0] sm:$0xff]
      %v250 = vld [vmem:[%s210 + $0xa8] sm:$0xff]
      %v251 = vld [vmem:[%s210 + $0xb0] sm:$0xff]
      %v252 = vpack.c.bf16 %v230, %v229
      %v253 = vpack.c.bf16 %v232, %v231
      %v254 = vpack.c.bf16 %v234, %v233
      %v255 = vpack.c.bf16 %v236, %v235
      %v256 = vpack.c.bf16 %v238, %v237
      %v257 = vpack.c.bf16 %v240, %v239
      %v258 = vpack.c.bf16 %v242, %v241
      %v259 = vpack.c.bf16 %v244, %v243
      %v260 = vpack.c.bf16 %v246, %v245
      %v261 = vld [vmem:[%s1] sm:$0x3]
      %v262 = vpack.c.bf16 %v247, %v247
      %s263 = scalar_lea.vmem %s1, 2
      %v264 = vld [vmem:[%s263] sm:$0x3]
      %vm265 = vsmask.f32 7424
      %v267 = vshrl.u32 %v252, 16
      %v269 = vshll.u32 %v252, 16
      %v271 = vrot.slane %v269, 1
      %v272 = vor.u32 %v267, %v271
      %v274 = vshll.u32 %v253, 16
      %v276 = vrot.slane %v274, 1
      %v277 = vsel %vm265, %v272, %v276
      %v278 = vshrl.u32 %v253, 16
      %v280 = vor.u32 %v278, %v276
      %v282 = vshll.u32 %v254, 16
      %v284 = vrot.slane %v282, 1
      %v285 = vsel %vm265, %v280, %v284
      %v286 = vshrl.u32 %v254, 16
      %v288 = vor.u32 %v286, %v284
      %v290 = vshll.u32 %v255, 16
      %v292 = vrot.slane %v290, 1
      %v293 = vsel %vm265, %v288, %v292
      %v294 = vshrl.u32 %v255, 16
      %v296 = vor.u32 %v294, %v292
      %v298 = vshll.u32 %v256, 16
      %v300 = vrot.slane %v298, 1
      %v301 = vsel %vm265, %v296, %v300
      %v302 = vshrl.u32 %v256, 16
      %v304 = vor.u32 %v302, %v300
      %v306 = vshll.u32 %v257, 16
      %v308 = vrot.slane %v306, 1
      %v309 = vsel %vm265, %v304, %v308
      %v310 = vshrl.u32 %v257, 16
      %v312 = vor.u32 %v310, %v308
      %v314 = vshll.u32 %v258, 16
      %v316 = vrot.slane %v314, 1
      %v317 = vsel %vm265, %v312, %v316
      %v318 = vshrl.u32 %v258, 16
      %v320 = vor.u32 %v318, %v316
      %v322 = vshll.u32 %v259, 16
      %v324 = vrot.slane %v322, 1
      %v325 = vsel %vm265, %v320, %v324
      %v326 = vshrl.u32 %v259, 16
      %v328 = vor.u32 %v326, %v324
      %v330 = vshll.u32 %v260, 16
      %v332 = vrot.slane %v330, 1
      %v333 = vsel %vm265, %v328, %v332
      %v334 = vshrl.u32 %v260, 16
      %v336 = vor.u32 %v334, %v332
      %v338 = vshll.u32 %v262, 16
      %v340 = vrot.slane %v338, 1
      %v341 = vsel %vm265, %v336, %v340
      %vm342 = vcmask 31744
      %v344 = vsel %vm342, %v277, 0
      %v347 = vsel %vm342, %v285, 0
      %v350 = vsel %vm342, %v293, 0
      %v353 = vsel %vm342, %v301, 0
      %v356 = vsel %vm342, %v309, 0
      %v359 = vsel %vm342, %v317, 0
      %v362 = vsel %vm342, %v325, 0
      %v365 = vsel %vm342, %v333, 0
      %v368 = vsel %vm342, %v341, 0
      %vm370 = vcmask 1041408
      %v372 = vsel %vm370, %v264, 0
      %374 = vmatprep.subr.bf16.mxu0 0
      %375 = vmatpush1.bf16.msra.mxu0 %v372
      %376 = vmatprep.subr.bf16.mxu0 0
      %377 = vmatpush1.bf16.msra.mxu0 0
      %378 = vmatprep.subr.bf16.mxu0 0
      %379 = vmatpush1.bf16.msra.mxu0 0
      %380 = vmatprep.subr.bf16.mxu0 0
      %381 = vmatpush1.bf16.msra.mxu0 0
      %382 = vmatprep.subr.bf16.mxu0 0
      %383 = vmatpush1.bf16.msra.mxu0 0
      %384 = vmatprep.subr.bf16.mxu0 0
      %385 = vmatpush1.bf16.msra.mxu0 0
      %386 = vmatprep.subr.bf16.mxu0 0
      %387 = vmatpush1.bf16.msra.mxu0 0
      %388 = vmatprep.subr.bf16.mxu0 0
      %389 = vmatpush1.bf16.msra.mxu0 0
      %390 = vmatprep.subr.bf16.mxu0 0
      %391 = vmatpush1.bf16.msra.mxu0 0
      %392 = vmatprep.subr.bf16.mxu0 0
      %393 = vmatpush1.bf16.msra.mxu0 0
      %394 = vmatprep.subr.bf16.mxu0 0
      %395 = vmatpush1.bf16.msra.mxu0 0
      %396 = vmatprep.subr.bf16.mxu0 0
      %397 = vmatpush1.bf16.msra.mxu0 0
      %398 = vmatprep.subr.bf16.mxu0 0
      %399 = vmatpush1.bf16.msra.mxu0 0
      %400 = vmatprep.subr.bf16.mxu0 0
      %401 = vmatpush1.bf16.msra.mxu0 0
      %402 = vmatprep.subr.bf16.mxu0 0
      %403 = vmatpush1.bf16.msra.mxu0 0
      %404 = vmatprep.subr.bf16.mxu0 0
      %405 = vmatpush1.bf16.msra.mxu0 0
      %406 = vmatprep.mubr.bf16.mxu0 0
      %407 = vmatmul.mubr.bf16.gmra.mrb[0].mxu0 %v344
      %v408 = vpop.f32.mrb[0].mxu0
      %v409 = vadd.f32 0.0, %v408
      %v410 = vpop.f32.mrb[0].mxu0
      %v411 = vpop.f32.mrb[0].mxu0
      %v412 = vadd.f32 0.0, %v411
      %v413 = vpop.f32.mrb[0].mxu0
      %414 = vmatprep.mubr.bf16.mxu0 0
      %415 = vmatmul.mubr.bf16.gmra.mrb[0].mxu0 %v347
      %v416 = vpop.f32.mrb[0].mxu0
      %v417 = vadd.f32 0.0, %v416
      %v418 = vpop.f32.mrb[0].mxu0
      %v419 = vpop.f32.mrb[0].mxu0
      %v420 = vadd.f32 0.0, %v419
      %v421 = vpop.f32.mrb[0].mxu0
      %422 = vmatprep.mubr.bf16.mxu0 0
      %423 = vmatmul.mubr.bf16.gmra.mrb[0].mxu0 %v350
      %v424 = vpop.f32.mrb[0].mxu0
      %v425 = vadd.f32 0.0, %v424
      %v426 = vpop.f32.mrb[0].mxu0
      %v427 = vpop.f32.mrb[0].mxu0
      %v428 = vadd.f32 0.0, %v427
      %v429 = vpop.f32.mrb[0].mxu0
      %430 = vmatprep.mubr.bf16.mxu0 0
      %431 = vmatmul.mubr.bf16.gmra.mrb[0].mxu0 %v353
      %v432 = vpop.f32.mrb[0].mxu0
      %v433 = vadd.f32 0.0, %v432
      %v434 = vpop.f32.mrb[0].mxu0
      %v435 = vpop.f32.mrb[0].mxu0
      %v436 = vadd.f32 0.0, %v435
      %v437 = vpop.f32.mrb[0].mxu0
      %438 = vmatprep.mubr.bf16.mxu0 0
      %439 = vmatmul.mubr.bf16.gmra.mrb[0].mxu0 %v356
      %v440 = vpop.f32.mrb[0].mxu0
      %v441 = vadd.f32 0.0, %v440
      %v442 = vpop.f32.mrb[0].mxu0
      %v443 = vpop.f32.mrb[0].mxu0
      %v444 = vadd.f32 0.0, %v443
      %v445 = vpop.f32.mrb[0].mxu0
      %446 = vmatprep.mubr.bf16.mxu0 0
      %447 = vmatmul.mubr.bf16.gmra.mrb[0].mxu0 %v359
      %v448 = vpop.f32.mrb[0].mxu0
      %v449 = vadd.f32 0.0, %v448
      %v450 = vpop.f32.mrb[0].mxu0
      %v451 = vpop.f32.mrb[0].mxu0
      %v452 = vadd.f32 0.0, %v451
      %v453 = vpop.f32.mrb[0].mxu0
      %454 = vmatprep.mubr.bf16.mxu0 0
      %455 = vmatmul.mubr.bf16.gmra.mrb[0].mxu0 %v362
      %v456 = vpop.f32.mrb[0].mxu0
      %v457 = vadd.f32 0.0, %v456
      %v458 = vpop.f32.mrb[0].mxu0
      %v459 = vpop.f32.mrb[0].mxu0
      %v460 = vadd.f32 0.0, %v459
      %v461 = vpop.f32.mrb[0].mxu0
      %462 = vmatprep.mubr.bf16.mxu0 0
      %463 = vmatmul.mubr.bf16.gmra.mrb[0].mxu0 %v365
      %v464 = vpop.f32.mrb[0].mxu0
      %v465 = vadd.f32 0.0, %v464
      %v466 = vpop.f32.mrb[0].mxu0
      %v467 = vpop.f32.mrb[0].mxu0
      %v468 = vadd.f32 0.0, %v467
      %v469 = vpop.f32.mrb[0].mxu0
      %470 = vmatprep.mubr.bf16.mxu0 0
      %471 = vmatmul.mubr.bf16.gmra.mrb[0].mxu0 %v368
      %v472 = vpop.f32.mrb[0].mxu0
      %v473 = vadd.f32 0.0, %v472
      %v474 = vpop.f32.mrb[0].mxu0
      %v475 = vpop.f32.mrb[0].mxu0
      %v476 = vadd.f32 0.0, %v475
      %v477 = vpop.f32.mrb[0].mxu0
      %478 = vdwg.mxu0
      %v479 = vsel %vm342, %v252, 0
      %v481 = vsel %vm342, %v253, 0
      %v483 = vsel %vm342, %v254, 0
      %v485 = vsel %vm342, %v255, 0
      %v487 = vsel %vm342, %v256, 0
      %v489 = vsel %vm342, %v257, 0
      %v491 = vsel %vm342, %v258, 0
      %v493 = vsel %vm342, %v259, 0
      %v495 = vsel %vm342, %v260, 0
      %v498 = vsel %vm370, %v261, 0
      %500 = vmatprep.subr.bf16.mxu0 0
      %501 = vmatpush1.bf16.msra.mxu0 %v498
      %502 = vmatprep.subr.bf16.mxu0 0
      %503 = vmatpush1.bf16.msra.mxu0 0
      %504 = vmatprep.subr.bf16.mxu0 0
      %505 = vmatpush1.bf16.msra.mxu0 0
      %506 = vmatprep.subr.bf16.mxu0 0
      %507 = vmatpush1.bf16.msra.mxu0 0
      %508 = vmatprep.subr.bf16.mxu0 0
      %509 = vmatpush1.bf16.msra.mxu0 0
      %510 = vmatprep.subr.bf16.mxu0 0
      %511 = vmatpush1.bf16.msra.mxu0 0
      %512 = vmatprep.subr.bf16.mxu0 0
      %513 = vmatpush1.bf16.msra.mxu0 0
      %514 = vmatprep.subr.bf16.mxu0 0
      %515 = vmatpush1.bf16.msra.mxu0 0
      %516 = vmatprep.subr.bf16.mxu0 0
      %517 = vmatpush1.bf16.msra.mxu0 0
      %518 = vmatprep.subr.bf16.mxu0 0
      %519 = vmatpush1.bf16.msra.mxu0 0
      %520 = vmatprep.subr.bf16.mxu0 0
      %521 = vmatpush1.bf16.msra.mxu0 0
      %522 = vmatprep.subr.bf16.mxu0 0
      %523 = vmatpush1.bf16.msra.mxu0 0
      %524 = vmatprep.subr.bf16.mxu0 0
      %525 = vmatpush1.bf16.msra.mxu0 0
      %526 = vmatprep.subr.bf16.mxu0 0
      %527 = vmatpush1.bf16.msra.mxu0 0
      %528 = vmatprep.subr.bf16.mxu0 0
      %529 = vmatpush1.bf16.msra.mxu0 0
      %530 = vmatprep.subr.bf16.mxu0 0
      %531 = vmatpush1.bf16.msra.mxu0 0
      %532 = vmatprep.mubr.bf16.mxu0 0
      %533 = vmatmul.mubr.bf16.gmra.mrb[0].mxu0 %v479
      %v534 = vpop.f32.mrb[0].mxu0
      %v535 = vadd.f32 %v409, %v534
      %v536 = vpop.f32.mrb[0].mxu0
      %v537 = vpop.f32.mrb[0].mxu0
      %v538 = vadd.f32 %v412, %v537
      %v539 = vpop.f32.mrb[0].mxu0
      %540 = vmatprep.mubr.bf16.mxu0 0
      %541 = vmatmul.mubr.bf16.gmra.mrb[0].mxu0 %v481
      %v542 = vpop.f32.mrb[0].mxu0
      %v543 = vadd.f32 %v417, %v542
      %v544 = vpop.f32.mrb[0].mxu0
      %v545 = vpop.f32.mrb[0].mxu0
      %v546 = vadd.f32 %v420, %v545
      %v547 = vpop.f32.mrb[0].mxu0
      %548 = vmatprep.mubr.bf16.mxu0 0
      %549 = vmatmul.mubr.bf16.gmra.mrb[0].mxu0 %v483
      %v550 = vpop.f32.mrb[0].mxu0
      %v551 = vadd.f32 %v425, %v550
      %v552 = vpop.f32.mrb[0].mxu0
      %v553 = vpop.f32.mrb[0].mxu0
      %v554 = vadd.f32 %v428, %v553
      %v555 = vpop.f32.mrb[0].mxu0
      %556 = vmatprep.mubr.bf16.mxu0 0
      %557 = vmatmul.mubr.bf16.gmra.mrb[0].mxu0 %v485
      %v558 = vpop.f32.mrb[0].mxu0
      %v559 = vadd.f32 %v433, %v558
      %v560 = vpop.f32.mrb[0].mxu0
      %v561 = vpop.f32.mrb[0].mxu0
      %v562 = vadd.f32 %v436, %v561
      %v563 = vpop.f32.mrb[0].mxu0
      %564 = vmatprep.mubr.bf16.mxu0 0
      %565 = vmatmul.mubr.bf16.gmra.mrb[0].mxu0 %v487
      %v566 = vpop.f32.mrb[0].mxu0
      %v567 = vadd.f32 %v441, %v566
      %v568 = vpop.f32.mrb[0].mxu0
      %v569 = vpop.f32.mrb[0].mxu0
      %v570 = vadd.f32 %v444, %v569
      %v571 = vpop.f32.mrb[0].mxu0
      %572 = vmatprep.mubr.bf16.mxu0 0
      %573 = vmatmul.mubr.bf16.gmra.mrb[0].mxu0 %v489
      %v574 = vpop.f32.mrb[0].mxu0
      %v575 = vadd.f32 %v449, %v574
      %v576 = vpop.f32.mrb[0].mxu0
      %v577 = vpop.f32.mrb[0].mxu0
      %v578 = vadd.f32 %v452, %v577
      %v579 = vpop.f32.mrb[0].mxu0
      %580 = vmatprep.mubr.bf16.mxu0 0
      %581 = vmatmul.mubr.bf16.gmra.mrb[0].mxu0 %v491
      %v582 = vpop.f32.mrb[0].mxu0
      %v583 = vadd.f32 %v457, %v582
      %v584 = vpop.f32.mrb[0].mxu0
      %v585 = vpop.f32.mrb[0].mxu0
      %v586 = vadd.f32 %v460, %v585
      %v587 = vpop.f32.mrb[0].mxu0
      %588 = vmatprep.mubr.bf16.mxu0 0
      %589 = vmatmul.mubr.bf16.gmra.mrb[0].mxu0 %v493
      %v590 = vpop.f32.mrb[0].mxu0
      %v591 = vadd.f32 %v465, %v590
      %v592 = vpop.f32.mrb[0].mxu0
      %v593 = vpop.f32.mrb[0].mxu0
      %v594 = vadd.f32 %v468, %v593
      %v595 = vpop.f32.mrb[0].mxu0
      %596 = vmatprep.mubr.bf16.mxu0 0
      %597 = vmatmul.mubr.bf16.gmra.mrb[0].mxu0 %v495
      %v598 = vpop.f32.mrb[0].mxu0
      %v599 = vadd.f32 %v473, %v598
      %v600 = vpop.f32.mrb[0].mxu0
      %v601 = vpop.f32.mrb[0].mxu0
      %v602 = vadd.f32 %v476, %v601
      %v603 = vpop.f32.mrb[0].mxu0
      %604 = vdwg.mxu0
      %s605 = scalar_lea.vmem %s1, 4
      %v606 = vld [vmem:[%s605] sm:$0x3]
      %vm617 = vcmask 1046528
      %v618 = vrot.slane %v252, 1
      %v619 = vrot.slane %v253, 1
      %v620 = vsel %vm617, %v618, %v619
      %v621 = vrot.slane %v254, 1
      %v622 = vsel %vm617, %v619, %v621
      %v623 = vrot.slane %v255, 1
      %v624 = vsel %vm617, %v621, %v623
      %v625 = vrot.slane %v256, 1
      %v626 = vsel %vm617, %v623, %v625
      %v627 = vrot.slane %v257, 1
      %v628 = vsel %vm617, %v625, %v627
      %v629 = vrot.slane %v258, 1
      %v630 = vsel %vm617, %v627, %v629
      %v631 = vrot.slane %v259, 1
      %v632 = vsel %vm617, %v629, %v631
      %v633 = vrot.slane %v260, 1
      %v634 = vsel %vm617, %v631, %v633
      %v635 = vrot.slane %v262, 1
      %v636 = vsel %vm617, %v633, %v635
      %v638 = vsel %vm342, %v620, 0
      %v641 = vsel %vm342, %v622, 0
      %v644 = vsel %vm342, %v624, 0
      %v647 = vsel %vm342, %v626, 0
      %v650 = vsel %vm342, %v628, 0
      %v653 = vsel %vm342, %v630, 0
      %v656 = vsel %vm342, %v632, 0
      %v659 = vsel %vm342, %v634, 0
      %v662 = vsel %vm342, %v636, 0
      %v665 = vsel %vm370, %v606, 0
      %667 = vmatprep.subr.bf16.mxu0 0
      %668 = vmatpush1.bf16.msra.mxu0 %v665
      %669 = vmatprep.subr.bf16.mxu0 0
      %670 = vmatpush1.bf16.msra.mxu0 0
      %671 = vmatprep.subr.bf16.mxu0 0
      %672 = vmatpush1.bf16.msra.mxu0 0
      %673 = vmatprep.subr.bf16.mxu0 0
      %674 = vmatpush1.bf16.msra.mxu0 0
      %675 = vmatprep.subr.bf16.mxu0 0
      %676 = vmatpush1.bf16.msra.mxu0 0
      %677 = vmatprep.subr.bf16.mxu0 0
      %678 = vmatpush1.bf16.msra.mxu0 0
      %679 = vmatprep.subr.bf16.mxu0 0
      %680 = vmatpush1.bf16.msra.mxu0 0
      %681 = vmatprep.subr.bf16.mxu0 0
      %682 = vmatpush1.bf16.msra.mxu0 0
      %683 = vmatprep.subr.bf16.mxu0 0
      %684 = vmatpush1.bf16.msra.mxu0 0
      %685 = vmatprep.subr.bf16.mxu0 0
      %686 = vmatpush1.bf16.msra.mxu0 0
      %687 = vmatprep.subr.bf16.mxu0 0
      %688 = vmatpush1.bf16.msra.mxu0 0
      %689 = vmatprep.subr.bf16.mxu0 0
      %690 = vmatpush1.bf16.msra.mxu0 0
      %691 = vmatprep.subr.bf16.mxu0 0
      %692 = vmatpush1.bf16.msra.mxu0 0
      %693 = vmatprep.subr.bf16.mxu0 0
      %694 = vmatpush1.bf16.msra.mxu0 0
      %695 = vmatprep.subr.bf16.mxu0 0
      %696 = vmatpush1.bf16.msra.mxu0 0
      %697 = vmatprep.subr.bf16.mxu0 0
      %698 = vmatpush1.bf16.msra.mxu0 0
      %699 = vmatprep.mubr.bf16.mxu0 0
      %700 = vmatmul.mubr.bf16.gmra.mrb[0].mxu0 %v638
      %v701 = vpop.f32.mrb[0].mxu0
      %v702 = vadd.f32 0.0, %v701
      %v703 = vpop.f32.mrb[0].mxu0
      %v704 = vpop.f32.mrb[0].mxu0
      %v705 = vadd.f32 0.0, %v704
      %v706 = vpop.f32.mrb[0].mxu0
      %707 = vmatprep.mubr.bf16.mxu0 0
      %708 = vmatmul.mubr.bf16.gmra.mrb[0].mxu0 %v641
      %v709 = vpop.f32.mrb[0].mxu0
      %v710 = vadd.f32 0.0, %v709
      %v711 = vpop.f32.mrb[0].mxu0
      %v712 = vpop.f32.mrb[0].mxu0
      %v713 = vadd.f32 0.0, %v712
      %v714 = vpop.f32.mrb[0].mxu0
      %715 = vmatprep.mubr.bf16.mxu0 0
      %716 = vmatmul.mubr.bf16.gmra.mrb[0].mxu0 %v644
      %v717 = vpop.f32.mrb[0].mxu0
      %v718 = vadd.f32 0.0, %v717
      %v719 = vpop.f32.mrb[0].mxu0
      %v720 = vpop.f32.mrb[0].mxu0
      %v721 = vadd.f32 0.0, %v720
      %v722 = vpop.f32.mrb[0].mxu0
      %723 = vmatprep.mubr.bf16.mxu0 0
      %724 = vmatmul.mubr.bf16.gmra.mrb[0].mxu0 %v647
      %v725 = vpop.f32.mrb[0].mxu0
      %v726 = vadd.f32 0.0, %v725
      %v727 = vpop.f32.mrb[0].mxu0
      %v728 = vpop.f32.mrb[0].mxu0
      %v729 = vadd.f32 0.0, %v728
      %v730 = vpop.f32.mrb[0].mxu0
      %731 = vmatprep.mubr.bf16.mxu0 0
      %732 = vmatmul.mubr.bf16.gmra.mrb[0].mxu0 %v650
      %v733 = vpop.f32.mrb[0].mxu0
      %v734 = vadd.f32 0.0, %v733
      %v735 = vpop.f32.mrb[0].mxu0
      %v736 = vpop.f32.mrb[0].mxu0
      %v737 = vadd.f32 0.0, %v736
      %v738 = vpop.f32.mrb[0].mxu0
      %739 = vmatprep.mubr.bf16.mxu0 0
      %740 = vmatmul.mubr.bf16.gmra.mrb[0].mxu0 %v653
      %v741 = vpop.f32.mrb[0].mxu0
      %v742 = vadd.f32 0.0, %v741
      %v743 = vpop.f32.mrb[0].mxu0
      %v744 = vpop.f32.mrb[0].mxu0
      %v745 = vadd.f32 0.0, %v744
      %v746 = vpop.f32.mrb[0].mxu0
      %747 = vmatprep.mubr.bf16.mxu0 0
      %748 = vmatmul.mubr.bf16.gmra.mrb[0].mxu0 %v656
      %v749 = vpop.f32.mrb[0].mxu0
      %v750 = vadd.f32 0.0, %v749
      %v751 = vpop.f32.mrb[0].mxu0
      %v752 = vpop.f32.mrb[0].mxu0
      %v753 = vadd.f32 0.0, %v752
      %v754 = vpop.f32.mrb[0].mxu0
      %755 = vmatprep.mubr.bf16.mxu0 0
      %756 = vmatmul.mubr.bf16.gmra.mrb[0].mxu0 %v659
      %v757 = vpop.f32.mrb[0].mxu0
      %v758 = vadd.f32 0.0, %v757
      %v759 = vpop.f32.mrb[0].mxu0
      %v760 = vpop.f32.mrb[0].mxu0
      %v761 = vadd.f32 0.0, %v760
      %v762 = vpop.f32.mrb[0].mxu0
      %763 = vmatprep.mubr.bf16.mxu0 0
      %764 = vmatmul.mubr.bf16.gmra.mrb[0].mxu0 %v662
      %v765 = vpop.f32.mrb[0].mxu0
      %v766 = vadd.f32 0.0, %v765
      %v767 = vpop.f32.mrb[0].mxu0
      %v768 = vpop.f32.mrb[0].mxu0
      %v769 = vadd.f32 0.0, %v768
      %v770 = vpop.f32.mrb[0].mxu0
      %771 = vdwg.mxu0
      %v772 = vadd.f32 %v535, %v702
      %v773 = vadd.f32 %v538, %v705
      %v774 = vadd.f32 %v543, %v710
      %v775 = vadd.f32 %v546, %v713
      %v776 = vadd.f32 %v551, %v718
      %v777 = vadd.f32 %v554, %v721
      %v778 = vadd.f32 %v559, %v726
      %v779 = vadd.f32 %v562, %v729
      %v780 = vadd.f32 %v567, %v734
      %v781 = vadd.f32 %v570, %v737
      %v782 = vadd.f32 %v575, %v742
      %v783 = vadd.f32 %v578, %v745
      %v784 = vadd.f32 %v583, %v750
      %v785 = vadd.f32 %v586, %v753
      %v786 = vadd.f32 %v591, %v758
      %v787 = vadd.f32 %v594, %v761
      %v788 = vadd.f32 %v599, %v766
      %v789 = vadd.f32 %v602, %v769
      %v790 = vpack.c.bf16 %v248, %v247
      %v791 = vpack.c.bf16 %v249, %v249
      %s792 = scalar_lea.vmem %s1, 6
      %v793 = vld [vmem:[%s792] sm:$0x3]
      %v796 = vrot.slane %v790, 1
      %v797 = vsel %vm617, %v633, %v796
      %v798 = vrot.slane %v791, 1
      %v799 = vsel %vm617, %v796, %v798
      %v801 = vsel %vm342, %v797, 0
      %v804 = vsel %vm342, %v799, 0
      %v807 = vsel %vm370, %v793, 0
      %809 = vmatprep.subr.bf16.mxu0 0
      %810 = vmatpush1.bf16.msra.mxu0 %v807
      %811 = vmatprep.subr.bf16.mxu0 0
      %812 = vmatpush1.bf16.msra.mxu0 0
      %813 = vmatprep.subr.bf16.mxu0 0
      %814 = vmatpush1.bf16.msra.mxu0 0
      %815 = vmatprep.subr.bf16.mxu0 0
      %816 = vmatpush1.bf16.msra.mxu0 0
      %817 = vmatprep.subr.bf16.mxu0 0
      %818 = vmatpush1.bf16.msra.mxu0 0
      %819 = vmatprep.subr.bf16.mxu0 0
      %820 = vmatpush1.bf16.msra.mxu0 0
      %821 = vmatprep.subr.bf16.mxu0 0
      %822 = vmatpush1.bf16.msra.mxu0 0
      %823 = vmatprep.subr.bf16.mxu0 0
      %824 = vmatpush1.bf16.msra.mxu0 0
      %825 = vmatprep.subr.bf16.mxu0 0
      %826 = vmatpush1.bf16.msra.mxu0 0
      %827 = vmatprep.subr.bf16.mxu0 0
      %828 = vmatpush1.bf16.msra.mxu0 0
      %829 = vmatprep.subr.bf16.mxu0 0
      %830 = vmatpush1.bf16.msra.mxu0 0
      %831 = vmatprep.subr.bf16.mxu0 0
      %832 = vmatpush1.bf16.msra.mxu0 0
      %833 = vmatprep.subr.bf16.mxu0 0
      %834 = vmatpush1.bf16.msra.mxu0 0
      %835 = vmatprep.subr.bf16.mxu0 0
      %836 = vmatpush1.bf16.msra.mxu0 0
      %837 = vmatprep.subr.bf16.mxu0 0
      %838 = vmatpush1.bf16.msra.mxu0 0
      %839 = vmatprep.subr.bf16.mxu0 0
      %840 = vmatpush1.bf16.msra.mxu0 0
      %841 = vmatprep.mubr.bf16.mxu0 0
      %842 = vmatmul.mubr.bf16.gmra.mrb[0].mxu0 %v641
      %v843 = vpop.f32.mrb[0].mxu0
      %v844 = vadd.f32 0.0, %v843
      %v845 = vpop.f32.mrb[0].mxu0
      %v846 = vpop.f32.mrb[0].mxu0
      %v847 = vadd.f32 0.0, %v846
      %v848 = vpop.f32.mrb[0].mxu0
      %849 = vmatprep.mubr.bf16.mxu0 0
      %850 = vmatmul.mubr.bf16.gmra.mrb[0].mxu0 %v644
      %v851 = vpop.f32.mrb[0].mxu0
      %v852 = vadd.f32 0.0, %v851
      %v853 = vpop.f32.mrb[0].mxu0
      %v854 = vpop.f32.mrb[0].mxu0
      %v855 = vadd.f32 0.0, %v854
      %v856 = vpop.f32.mrb[0].mxu0
      %857 = vmatprep.mubr.bf16.mxu0 0
      %858 = vmatmul.mubr.bf16.gmra.mrb[0].mxu0 %v647
      %v859 = vpop.f32.mrb[0].mxu0
      %v860 = vadd.f32 0.0, %v859
      %v861 = vpop.f32.mrb[0].mxu0
      %v862 = vpop.f32.mrb[0].mxu0
      %v863 = vadd.f32 0.0, %v862
      %v864 = vpop.f32.mrb[0].mxu0
      %865 = vmatprep.mubr.bf16.mxu0 0
      %866 = vmatmul.mubr.bf16.gmra.mrb[0].mxu0 %v650
      %v867 = vpop.f32.mrb[0].mxu0
      %v868 = vadd.f32 0.0, %v867
      %v869 = vpop.f32.mrb[0].mxu0
      %v870 = vpop.f32.mrb[0].mxu0
      %v871 = vadd.f32 0.0, %v870
      %v872 = vpop.f32.mrb[0].mxu0
      %873 = vmatprep.mubr.bf16.mxu0 0
      %874 = vmatmul.mubr.bf16.gmra.mrb[0].mxu0 %v653
      %v875 = vpop.f32.mrb[0].mxu0
      %v876 = vadd.f32 0.0, %v875
      %v877 = vpop.f32.mrb[0].mxu0
      %v878 = vpop.f32.mrb[0].mxu0
      %v879 = vadd.f32 0.0, %v878
      %v880 = vpop.f32.mrb[0].mxu0
      %881 = vmatprep.mubr.bf16.mxu0 0
      %882 = vmatmul.mubr.bf16.gmra.mrb[0].mxu0 %v656
      %v883 = vpop.f32.mrb[0].mxu0
      %v884 = vadd.f32 0.0, %v883
      %v885 = vpop.f32.mrb[0].mxu0
      %v886 = vpop.f32.mrb[0].mxu0
      %v887 = vadd.f32 0.0, %v886
      %v888 = vpop.f32.mrb[0].mxu0
      %889 = vmatprep.mubr.bf16.mxu0 0
      %890 = vmatmul.mubr.bf16.gmra.mrb[0].mxu0 %v659
      %v891 = vpop.f32.mrb[0].mxu0
      %v892 = vadd.f32 0.0, %v891
      %v893 = vpop.f32.mrb[0].mxu0
      %v894 = vpop.f32.mrb[0].mxu0
      %v895 = vadd.f32 0.0, %v894
      %v896 = vpop.f32.mrb[0].mxu0
      %897 = vmatprep.mubr.bf16.mxu0 0
      %898 = vmatmul.mubr.bf16.gmra.mrb[0].mxu0 %v801
      %v899 = vpop.f32.mrb[0].mxu0
      %v900 = vadd.f32 0.0, %v899
      %v901 = vpop.f32.mrb[0].mxu0
      %v902 = vpop.f32.mrb[0].mxu0
      %v903 = vadd.f32 0.0, %v902
      %v904 = vpop.f32.mrb[0].mxu0
      %905 = vmatprep.mubr.bf16.mxu0 0
      %906 = vmatmul.mubr.bf16.gmra.mrb[0].mxu0 %v804
      %v907 = vpop.f32.mrb[0].mxu0
      %v908 = vadd.f32 0.0, %v907
      %v909 = vpop.f32.mrb[0].mxu0
      %v910 = vpop.f32.mrb[0].mxu0
      %v911 = vadd.f32 0.0, %v910
      %v912 = vpop.f32.mrb[0].mxu0
      %913 = vdwg.mxu0
      %v914 = vadd.f32 %v772, %v844
      %v915 = vadd.f32 %v773, %v847
      %v916 = vadd.f32 %v774, %v852
      %v917 = vadd.f32 %v775, %v855
      %v918 = vadd.f32 %v776, %v860
      %v919 = vadd.f32 %v777, %v863
      %v920 = vadd.f32 %v778, %v868
      %v921 = vadd.f32 %v779, %v871
      %v922 = vadd.f32 %v780, %v876
      %v923 = vadd.f32 %v781, %v879
      %v924 = vadd.f32 %v782, %v884
      %v925 = vadd.f32 %v783, %v887
      %v926 = vadd.f32 %v784, %v892
      %v927 = vadd.f32 %v785, %v895
      %v928 = vadd.f32 %v786, %v900
      %v929 = vadd.f32 %v787, %v903
      %v930 = vadd.f32 %v788, %v908
      %v931 = vadd.f32 %v789, %v911
      %s932 = scalar_lea.vmem %s1, 8
      %v933 = vld [vmem:[%s932] sm:$0x3]
      %vm934 = vsmask.f32 6400
      %v935 = vrot.slane %v278, 1
      %v936 = vrot.slane %v274, 2
      %v937 = vor.u32 %v935, %v936
      %v938 = vrot.slane %v286, 1
      %v939 = vrot.slane %v282, 2
      %v940 = vor.u32 %v938, %v939
      %v941 = vsel %vm934, %v937, %v940
      %v942 = vrot.slane %v294, 1
      %v943 = vrot.slane %v290, 2
      %v944 = vor.u32 %v942, %v943
      %v945 = vsel %vm934, %v940, %v944
      %v946 = vrot.slane %v302, 1
      %v947 = vrot.slane %v298, 2
      %v948 = vor.u32 %v946, %v947
      %v949 = vsel %vm934, %v944, %v948
      %v950 = vrot.slane %v310, 1
      %v951 = vrot.slane %v306, 2
      %v952 = vor.u32 %v950, %v951
      %v953 = vsel %vm934, %v948, %v952
      %v954 = vrot.slane %v318, 1
      %v955 = vrot.slane %v314, 2
      %v956 = vor.u32 %v954, %v955
      %v957 = vsel %vm934, %v952, %v956
      %v958 = vrot.slane %v326, 1
      %v959 = vrot.slane %v322, 2
      %v960 = vor.u32 %v958, %v959
      %v961 = vsel %vm934, %v956, %v960
      %v962 = vrot.slane %v334, 1
      %v963 = vrot.slane %v330, 2
      %v964 = vor.u32 %v962, %v963
      %v965 = vsel %vm934, %v960, %v964
      %v967 = vshrl.u32 %v790, 16
      %v969 = vrot.slane %v967, 1
      %v970 = vshll.u32 %v790, 16
      %v972 = vrot.slane %v970, 2
      %v973 = vor.u32 %v969, %v972
      %v974 = vsel %vm934, %v964, %v973
      %v976 = vshrl.u32 %v791, 16
      %v978 = vrot.slane %v976, 1
      %v979 = vshll.u32 %v791, 16
      %v981 = vrot.slane %v979, 2
      %v982 = vor.u32 %v978, %v981
      %v983 = vsel %vm934, %v973, %v982
      %v985 = vsel %vm342, %v941, 0
      %v988 = vsel %vm342, %v945, 0
      %v991 = vsel %vm342, %v949, 0
      %v994 = vsel %vm342, %v953, 0
      %v997 = vsel %vm342, %v957, 0
      %v1000 = vsel %vm342, %v961, 0
      %v1003 = vsel %vm342, %v965, 0
      %v1006 = vsel %vm342, %v974, 0
      %v1009 = vsel %vm342, %v983, 0
      %v1012 = vsel %vm370, %v933, 0
      %1014 = vmatprep.subr.bf16.mxu0 0
      %1015 = vmatpush1.bf16.msra.mxu0 %v1012
      %1016 = vmatprep.subr.bf16.mxu0 0
      %1017 = vmatpush1.bf16.msra.mxu0 0
      %1018 = vmatprep.subr.bf16.mxu0 0
      %1019 = vmatpush1.bf16.msra.mxu0 0
      %1020 = vmatprep.subr.bf16.mxu0 0
      %1021 = vmatpush1.bf16.msra.mxu0 0
      %1022 = vmatprep.subr.bf16.mxu0 0
      %1023 = vmatpush1.bf16.msra.mxu0 0
      %1024 = vmatprep.subr.bf16.mxu0 0
      %1025 = vmatpush1.bf16.msra.mxu0 0
      %1026 = vmatprep.subr.bf16.mxu0 0
      %1027 = vmatpush1.bf16.msra.mxu0 0
      %1028 = vmatprep.subr.bf16.mxu0 0
      %1029 = vmatpush1.bf16.msra.mxu0 0
      %1030 = vmatprep.subr.bf16.mxu0 0
      %1031 = vmatpush1.bf16.msra.mxu0 0
      %1032 = vmatprep.subr.bf16.mxu0 0
      %1033 = vmatpush1.bf16.msra.mxu0 0
      %1034 = vmatprep.subr.bf16.mxu0 0
      %1035 = vmatpush1.bf16.msra.mxu0 0
      %1036 = vmatprep.subr.bf16.mxu0 0
      %1037 = vmatpush1.bf16.msra.mxu0 0
      %1038 = vmatprep.subr.bf16.mxu0 0
      %1039 = vmatpush1.bf16.msra.mxu0 0
      %1040 = vmatprep.subr.bf16.mxu0 0
      %1041 = vmatpush1.bf16.msra.mxu0 0
      %1042 = vmatprep.subr.bf16.mxu0 0
      %1043 = vmatpush1.bf16.msra.mxu0 0
      %1044 = vmatprep.subr.bf16.mxu0 0
      %1045 = vmatpush1.bf16.msra.mxu0 0
      %1046 = vmatprep.mubr.bf16.mxu0 0
      %1047 = vmatmul.mubr.bf16.gmra.mrb[0].mxu0 %v985
      %v1048 = vpop.f32.mrb[0].mxu0
      %v1049 = vadd.f32 0.0, %v1048
      %v1050 = vpop.f32.mrb[0].mxu0
      %v1051 = vpop.f32.mrb[0].mxu0
      %v1052 = vadd.f32 0.0, %v1051
      %v1053 = vpop.f32.mrb[0].mxu0
      %1054 = vmatprep.mubr.bf16.mxu0 0
      %1055 = vmatmul.mubr.bf16.gmra.mrb[0].mxu0 %v988
      %v1056 = vpop.f32.mrb[0].mxu0
      %v1057 = vadd.f32 0.0, %v1056
      %v1058 = vpop.f32.mrb[0].mxu0
      %v1059 = vpop.f32.mrb[0].mxu0
      %v1060 = vadd.f32 0.0, %v1059
      %v1061 = vpop.f32.mrb[0].mxu0
      %1062 = vmatprep.mubr.bf16.mxu0 0
      %1063 = vmatmul.mubr.bf16.gmra.mrb[0].mxu0 %v991
      %v1064 = vpop.f32.mrb[0].mxu0
      %v1065 = vadd.f32 0.0, %v1064
      %v1066 = vpop.f32.mrb[0].mxu0
      %v1067 = vpop.f32.mrb[0].mxu0
      %v1068 = vadd.f32 0.0, %v1067
      %v1069 = vpop.f32.mrb[0].mxu0
      %1070 = vmatprep.mubr.bf16.mxu0 0
      %1071 = vmatmul.mubr.bf16.gmra.mrb[0].mxu0 %v994
      %v1072 = vpop.f32.mrb[0].mxu0
      %v1073 = vadd.f32 0.0, %v1072
      %v1074 = vpop.f32.mrb[0].mxu0
      %v1075 = vpop.f32.mrb[0].mxu0
      %v1076 = vadd.f32 0.0, %v1075
      %v1077 = vpop.f32.mrb[0].mxu0
      %1078 = vmatprep.mubr.bf16.mxu0 0
      %1079 = vmatmul.mubr.bf16.gmra.mrb[0].mxu0 %v997
      %v1080 = vpop.f32.mrb[0].mxu0
      %v1081 = vadd.f32 0.0, %v1080
      %v1082 = vpop.f32.mrb[0].mxu0
      %v1083 = vpop.f32.mrb[0].mxu0
      %v1084 = vadd.f32 0.0, %v1083
      %v1085 = vpop.f32.mrb[0].mxu0
      %1086 = vmatprep.mubr.bf16.mxu0 0
      %1087 = vmatmul.mubr.bf16.gmra.mrb[0].mxu0 %v1000
      %v1088 = vpop.f32.mrb[0].mxu0
      %v1089 = vadd.f32 0.0, %v1088
      %v1090 = vpop.f32.mrb[0].mxu0
      %v1091 = vpop.f32.mrb[0].mxu0
      %v1092 = vadd.f32 0.0, %v1091
      %v1093 = vpop.f32.mrb[0].mxu0
      %1094 = vmatprep.mubr.bf16.mxu0 0
      %1095 = vmatmul.mubr.bf16.gmra.mrb[0].mxu0 %v1003
      %v1096 = vpop.f32.mrb[0].mxu0
      %v1097 = vadd.f32 0.0, %v1096
      %v1098 = vpop.f32.mrb[0].mxu0
      %v1099 = vpop.f32.mrb[0].mxu0
      %v1100 = vadd.f32 0.0, %v1099
      %v1101 = vpop.f32.mrb[0].mxu0
      %1102 = vmatprep.mubr.bf16.mxu0 0
      %1103 = vmatmul.mubr.bf16.gmra.mrb[0].mxu0 %v1006
      %v1104 = vpop.f32.mrb[0].mxu0
      %v1105 = vadd.f32 0.0, %v1104
      %v1106 = vpop.f32.mrb[0].mxu0
      %v1107 = vpop.f32.mrb[0].mxu0
      %v1108 = vadd.f32 0.0, %v1107
      %v1109 = vpop.f32.mrb[0].mxu0
      %1110 = vmatprep.mubr.bf16.mxu0 0
      %1111 = vmatmul.mubr.bf16.gmra.mrb[0].mxu0 %v1009
      %v1112 = vpop.f32.mrb[0].mxu0
      %v1113 = vadd.f32 0.0, %v1112
      %v1114 = vpop.f32.mrb[0].mxu0
      %v1115 = vpop.f32.mrb[0].mxu0
      %v1116 = vadd.f32 0.0, %v1115
      %v1117 = vpop.f32.mrb[0].mxu0
      %1118 = vdwg.mxu0
      %v1119 = vadd.f32 %v914, %v1049
      %v1120 = vadd.f32 %v915, %v1052
      %v1121 = vadd.f32 %v916, %v1057
      %v1122 = vadd.f32 %v917, %v1060
      %v1123 = vadd.f32 %v918, %v1065
      %v1124 = vadd.f32 %v919, %v1068
      %v1125 = vadd.f32 %v920, %v1073
      %v1126 = vadd.f32 %v921, %v1076
      %v1127 = vadd.f32 %v922, %v1081
      %v1128 = vadd.f32 %v923, %v1084
      %v1129 = vadd.f32 %v924, %v1089
      %v1130 = vadd.f32 %v925, %v1092
      %v1131 = vadd.f32 %v926, %v1097
      %v1132 = vadd.f32 %v927, %v1100
      %v1133 = vadd.f32 %v928, %v1105
      %v1134 = vadd.f32 %v929, %v1108
      %v1135 = vadd.f32 %v930, %v1113
      %v1136 = vadd.f32 %v931, %v1116
      %s1137 = scalar_lea.vmem %s1, 10
      %v1138 = vld [vmem:[%s1137] sm:$0x3]
      %vm1139 = vcmask 1045504
      %v1140 = vrot.slane %v253, 2
      %v1141 = vrot.slane %v254, 2
      %v1142 = vsel %vm1139, %v1140, %v1141
      %v1143 = vrot.slane %v255, 2
      %v1144 = vsel %vm1139, %v1141, %v1143
      %v1145 = vrot.slane %v256, 2
      %v1146 = vsel %vm1139, %v1143, %v1145
      %v1147 = vrot.slane %v257, 2
      %v1148 = vsel %vm1139, %v1145, %v1147
      %v1149 = vrot.slane %v258, 2
      %v1150 = vsel %vm1139, %v1147, %v1149
      %v1151 = vrot.slane %v259, 2
      %v1152 = vsel %vm1139, %v1149, %v1151
      %v1153 = vrot.slane %v260, 2
      %v1154 = vsel %vm1139, %v1151, %v1153
      %v1155 = vrot.slane %v790, 2
      %v1156 = vsel %vm1139, %v1153, %v1155
      %v1157 = vrot.slane %v791, 2
      %v1158 = vsel %vm1139, %v1155, %v1157
      %v1160 = vsel %vm342, %v1142, 0
      %v1163 = vsel %vm342, %v1144, 0
      %v1166 = vsel %vm342, %v1146, 0
      %v1169 = vsel %vm342, %v1148, 0
      %v1172 = vsel %vm342, %v1150, 0
      %v1175 = vsel %vm342, %v1152, 0
      %v1178 = vsel %vm342, %v1154, 0
      %v1181 = vsel %vm342, %v1156, 0
      %v1184 = vsel %vm342, %v1158, 0
      %v1187 = vsel %vm370, %v1138, 0
      %1189 = vmatprep.subr.bf16.mxu0 0
      %1190 = vmatpush1.bf16.msra.mxu0 %v1187
      %1191 = vmatprep.subr.bf16.mxu0 0
      %1192 = vmatpush1.bf16.msra.mxu0 0
      %1193 = vmatprep.subr.bf16.mxu0 0
      %1194 = vmatpush1.bf16.msra.mxu0 0
      %1195 = vmatprep.subr.bf16.mxu0 0
      %1196 = vmatpush1.bf16.msra.mxu0 0
      %1197 = vmatprep.subr.bf16.mxu0 0
      %1198 = vmatpush1.bf16.msra.mxu0 0
      %1199 = vmatprep.subr.bf16.mxu0 0
      %1200 = vmatpush1.bf16.msra.mxu0 0
      %1201 = vmatprep.subr.bf16.mxu0 0
      %1202 = vmatpush1.bf16.msra.mxu0 0
      %1203 = vmatprep.subr.bf16.mxu0 0
      %1204 = vmatpush1.bf16.msra.mxu0 0
      %1205 = vmatprep.subr.bf16.mxu0 0
      %1206 = vmatpush1.bf16.msra.mxu0 0
      %1207 = vmatprep.subr.bf16.mxu0 0
      %1208 = vmatpush1.bf16.msra.mxu0 0
      %1209 = vmatprep.subr.bf16.mxu0 0
      %1210 = vmatpush1.bf16.msra.mxu0 0
      %1211 = vmatprep.subr.bf16.mxu0 0
      %1212 = vmatpush1.bf16.msra.mxu0 0
      %1213 = vmatprep.subr.bf16.mxu0 0
      %1214 = vmatpush1.bf16.msra.mxu0 0
      %1215 = vmatprep.subr.bf16.mxu0 0
      %1216 = vmatpush1.bf16.msra.mxu0 0
      %1217 = vmatprep.subr.bf16.mxu0 0
      %1218 = vmatpush1.bf16.msra.mxu0 0
      %1219 = vmatprep.subr.bf16.mxu0 0
      %1220 = vmatpush1.bf16.msra.mxu0 0
      %1221 = vmatprep.mubr.bf16.mxu0 0
      %1222 = vmatmul.mubr.bf16.gmra.mrb[0].mxu0 %v1160
      %v1223 = vpop.f32.mrb[0].mxu0
      %v1224 = vadd.f32 0.0, %v1223
      %v1225 = vpop.f32.mrb[0].mxu0
      %v1226 = vpop.f32.mrb[0].mxu0
      %v1227 = vadd.f32 0.0, %v1226
      %v1228 = vpop.f32.mrb[0].mxu0
      %1229 = vmatprep.mubr.bf16.mxu0 0
      %1230 = vmatmul.mubr.bf16.gmra.mrb[0].mxu0 %v1163
      %v1231 = vpop.f32.mrb[0].mxu0
      %v1232 = vadd.f32 0.0, %v1231
      %v1233 = vpop.f32.mrb[0].mxu0
      %v1234 = vpop.f32.mrb[0].mxu0
      %v1235 = vadd.f32 0.0, %v1234
      %v1236 = vpop.f32.mrb[0].mxu0
      %1237 = vmatprep.mubr.bf16.mxu0 0
      %1238 = vmatmul.mubr.bf16.gmra.mrb[0].mxu0 %v1166
      %v1239 = vpop.f32.mrb[0].mxu0
      %v1240 = vadd.f32 0.0, %v1239
      %v1241 = vpop.f32.mrb[0].mxu0
      %v1242 = vpop.f32.mrb[0].mxu0
      %v1243 = vadd.f32 0.0, %v1242
      %v1244 = vpop.f32.mrb[0].mxu0
      %1245 = vmatprep.mubr.bf16.mxu0 0
      %1246 = vmatmul.mubr.bf16.gmra.mrb[0].mxu0 %v1169
      %v1247 = vpop.f32.mrb[0].mxu0
      %v1248 = vadd.f32 0.0, %v1247
      %v1249 = vpop.f32.mrb[0].mxu0
      %v1250 = vpop.f32.mrb[0].mxu0
      %v1251 = vadd.f32 0.0, %v1250
      %v1252 = vpop.f32.mrb[0].mxu0
      %1253 = vmatprep.mubr.bf16.mxu0 0
      %1254 = vmatmul.mubr.bf16.gmra.mrb[0].mxu0 %v1172
      %v1255 = vpop.f32.mrb[0].mxu0
      %v1256 = vadd.f32 0.0, %v1255
      %v1257 = vpop.f32.mrb[0].mxu0
      %v1258 = vpop.f32.mrb[0].mxu0
      %v1259 = vadd.f32 0.0, %v1258
      %v1260 = vpop.f32.mrb[0].mxu0
      %1261 = vmatprep.mubr.bf16.mxu0 0
      %1262 = vmatmul.mubr.bf16.gmra.mrb[0].mxu0 %v1175
      %v1263 = vpop.f32.mrb[0].mxu0
      %v1264 = vadd.f32 0.0, %v1263
      %v1265 = vpop.f32.mrb[0].mxu0
      %v1266 = vpop.f32.mrb[0].mxu0
      %v1267 = vadd.f32 0.0, %v1266
      %v1268 = vpop.f32.mrb[0].mxu0
      %1269 = vmatprep.mubr.bf16.mxu0 0
      %1270 = vmatmul.mubr.bf16.gmra.mrb[0].mxu0 %v1178
      %v1271 = vpop.f32.mrb[0].mxu0
      %v1272 = vadd.f32 0.0, %v1271
      %v1273 = vpop.f32.mrb[0].mxu0
      %v1274 = vpop.f32.mrb[0].mxu0
      %v1275 = vadd.f32 0.0, %v1274
      %v1276 = vpop.f32.mrb[0].mxu0
      %1277 = vmatprep.mubr.bf16.mxu0 0
      %1278 = vmatmul.mubr.bf16.gmra.mrb[0].mxu0 %v1181
      %v1279 = vpop.f32.mrb[0].mxu0
      %v1280 = vadd.f32 0.0, %v1279
      %v1281 = vpop.f32.mrb[0].mxu0
      %v1282 = vpop.f32.mrb[0].mxu0
      %v1283 = vadd.f32 0.0, %v1282
      %v1284 = vpop.f32.mrb[0].mxu0
      %1285 = vmatprep.mubr.bf16.mxu0 0
      %1286 = vmatmul.mubr.bf16.gmra.mrb[0].mxu0 %v1184
      %v1287 = vpop.f32.mrb[0].mxu0
      %v1288 = vadd.f32 0.0, %v1287
      %v1289 = vpop.f32.mrb[0].mxu0
      %v1290 = vpop.f32.mrb[0].mxu0
      %v1291 = vadd.f32 0.0, %v1290
      %v1292 = vpop.f32.mrb[0].mxu0
      %1293 = vdwg.mxu0
      %v1294 = vadd.f32 %v1119, %v1224
      %v1295 = vadd.f32 %v1120, %v1227
      %v1296 = vadd.f32 %v1121, %v1232
      %v1297 = vadd.f32 %v1122, %v1235
      %v1298 = vadd.f32 %v1123, %v1240
      %v1299 = vadd.f32 %v1124, %v1243
      %v1300 = vadd.f32 %v1125, %v1248
      %v1301 = vadd.f32 %v1126, %v1251
      %v1302 = vadd.f32 %v1127, %v1256
      %v1303 = vadd.f32 %v1128, %v1259
      %v1304 = vadd.f32 %v1129, %v1264
      %v1305 = vadd.f32 %v1130, %v1267
      %v1306 = vadd.f32 %v1131, %v1272
      %v1307 = vadd.f32 %v1132, %v1275
      %v1308 = vadd.f32 %v1133, %v1280
      %v1309 = vadd.f32 %v1134, %v1283
      %v1310 = vadd.f32 %v1135, %v1288
      %v1311 = vadd.f32 %v1136, %v1291
      %v1312 = vpack.c.bf16 %v250, %v249
      %v1313 = vpack.c.bf16 %v251, %v251
      %s1314 = scalar_lea.vmem %s1, 12
      %v1315 = vld [vmem:[%s1314] sm:$0x3]
      %v1318 = vrot.slane %v1312, 2
      %v1319 = vsel %vm1139, %v1155, %v1318
      %v1320 = vrot.slane %v1313, 2
      %v1321 = vsel %vm1139, %v1318, %v1320
      %v1323 = vsel %vm342, %v1319, 0
      %v1326 = vsel %vm342, %v1321, 0
      %v1329 = vsel %vm370, %v1315, 0
      %1331 = vmatprep.subr.bf16.mxu0 0
      %1332 = vmatpush1.bf16.msra.mxu0 %v1329
      %1333 = vmatprep.subr.bf16.mxu0 0
      %1334 = vmatpush1.bf16.msra.mxu0 0
      %1335 = vmatprep.subr.bf16.mxu0 0
      %1336 = vmatpush1.bf16.msra.mxu0 0
      %1337 = vmatprep.subr.bf16.mxu0 0
      %1338 = vmatpush1.bf16.msra.mxu0 0
      %1339 = vmatprep.subr.bf16.mxu0 0
      %1340 = vmatpush1.bf16.msra.mxu0 0
      %1341 = vmatprep.subr.bf16.mxu0 0
      %1342 = vmatpush1.bf16.msra.mxu0 0
      %1343 = vmatprep.subr.bf16.mxu0 0
      %1344 = vmatpush1.bf16.msra.mxu0 0
      %1345 = vmatprep.subr.bf16.mxu0 0
      %1346 = vmatpush1.bf16.msra.mxu0 0
      %1347 = vmatprep.subr.bf16.mxu0 0
      %1348 = vmatpush1.bf16.msra.mxu0 0
      %1349 = vmatprep.subr.bf16.mxu0 0
      %1350 = vmatpush1.bf16.msra.mxu0 0
      %1351 = vmatprep.subr.bf16.mxu0 0
      %1352 = vmatpush1.bf16.msra.mxu0 0
      %1353 = vmatprep.subr.bf16.mxu0 0
      %1354 = vmatpush1.bf16.msra.mxu0 0
      %1355 = vmatprep.subr.bf16.mxu0 0
      %1356 = vmatpush1.bf16.msra.mxu0 0
      %1357 = vmatprep.subr.bf16.mxu0 0
      %1358 = vmatpush1.bf16.msra.mxu0 0
      %1359 = vmatprep.subr.bf16.mxu0 0
      %1360 = vmatpush1.bf16.msra.mxu0 0
      %1361 = vmatprep.subr.bf16.mxu0 0
      %1362 = vmatpush1.bf16.msra.mxu0 0
      %1363 = vmatprep.mubr.bf16.mxu0 0
      %1364 = vmatmul.mubr.bf16.gmra.mrb[0].mxu0 %v1163
      %v1365 = vpop.f32.mrb[0].mxu0
      %v1366 = vadd.f32 0.0, %v1365
      %v1367 = vpop.f32.mrb[0].mxu0
      %v1368 = vpop.f32.mrb[0].mxu0
      %v1369 = vadd.f32 0.0, %v1368
      %v1370 = vpop.f32.mrb[0].mxu0
      %1371 = vmatprep.mubr.bf16.mxu0 0
      %1372 = vmatmul.mubr.bf16.gmra.mrb[0].mxu0 %v1166
      %v1373 = vpop.f32.mrb[0].mxu0
      %v1374 = vadd.f32 0.0, %v1373
      %v1375 = vpop.f32.mrb[0].mxu0
      %v1376 = vpop.f32.mrb[0].mxu0
      %v1377 = vadd.f32 0.0, %v1376
      %v1378 = vpop.f32.mrb[0].mxu0
      %1379 = vmatprep.mubr.bf16.mxu0 0
      %1380 = vmatmul.mubr.bf16.gmra.mrb[0].mxu0 %v1169
      %v1381 = vpop.f32.mrb[0].mxu0
      %v1382 = vadd.f32 0.0, %v1381
      %v1383 = vpop.f32.mrb[0].mxu0
      %v1384 = vpop.f32.mrb[0].mxu0
      %v1385 = vadd.f32 0.0, %v1384
      %v1386 = vpop.f32.mrb[0].mxu0
      %1387 = vmatprep.mubr.bf16.mxu0 0
      %1388 = vmatmul.mubr.bf16.gmra.mrb[0].mxu0 %v1172
      %v1389 = vpop.f32.mrb[0].mxu0
      %v1390 = vadd.f32 0.0, %v1389
      %v1391 = vpop.f32.mrb[0].mxu0
      %v1392 = vpop.f32.mrb[0].mxu0
      %v1393 = vadd.f32 0.0, %v1392
      %v1394 = vpop.f32.mrb[0].mxu0
      %1395 = vmatprep.mubr.bf16.mxu0 0
      %1396 = vmatmul.mubr.bf16.gmra.mrb[0].mxu0 %v1175
      %v1397 = vpop.f32.mrb[0].mxu0
      %v1398 = vadd.f32 0.0, %v1397
      %v1399 = vpop.f32.mrb[0].mxu0
      %v1400 = vpop.f32.mrb[0].mxu0
      %v1401 = vadd.f32 0.0, %v1400
      %v1402 = vpop.f32.mrb[0].mxu0
      %1403 = vmatprep.mubr.bf16.mxu0 0
      %1404 = vmatmul.mubr.bf16.gmra.mrb[0].mxu0 %v1178
      %v1405 = vpop.f32.mrb[0].mxu0
      %v1406 = vadd.f32 0.0, %v1405
      %v1407 = vpop.f32.mrb[0].mxu0
      %v1408 = vpop.f32.mrb[0].mxu0
      %v1409 = vadd.f32 0.0, %v1408
      %v1410 = vpop.f32.mrb[0].mxu0
      %1411 = vmatprep.mubr.bf16.mxu0 0
      %1412 = vmatmul.mubr.bf16.gmra.mrb[0].mxu0 %v1181
      %v1413 = vpop.f32.mrb[0].mxu0
      %v1414 = vadd.f32 0.0, %v1413
      %v1415 = vpop.f32.mrb[0].mxu0
      %v1416 = vpop.f32.mrb[0].mxu0
      %v1417 = vadd.f32 0.0, %v1416
      %v1418 = vpop.f32.mrb[0].mxu0
      %1419 = vmatprep.mubr.bf16.mxu0 0
      %1420 = vmatmul.mubr.bf16.gmra.mrb[0].mxu0 %v1323
      %v1421 = vpop.f32.mrb[0].mxu0
      %v1422 = vadd.f32 0.0, %v1421
      %v1423 = vpop.f32.mrb[0].mxu0
      %v1424 = vpop.f32.mrb[0].mxu0
      %v1425 = vadd.f32 0.0, %v1424
      %v1426 = vpop.f32.mrb[0].mxu0
      %1427 = vmatprep.mubr.bf16.mxu0 0
      %1428 = vmatmul.mubr.bf16.gmra.mrb[0].mxu0 %v1326
      %v1429 = vpop.f32.mrb[0].mxu0
      %v1430 = vadd.f32 0.0, %v1429
      %v1431 = vpop.f32.mrb[0].mxu0
      %v1432 = vpop.f32.mrb[0].mxu0
      %v1433 = vadd.f32 0.0, %v1432
      %v1434 = vpop.f32.mrb[0].mxu0
      %1435 = vdwg.mxu0
      %v1436 = vadd.f32 %v1294, %v1366
      %v1437 = vadd.f32 %v1295, %v1369
      %v1438 = vadd.f32 %v1296, %v1374
      %v1439 = vadd.f32 %v1297, %v1377
      %v1440 = vadd.f32 %v1298, %v1382
      %v1441 = vadd.f32 %v1299, %v1385
      %v1442 = vadd.f32 %v1300, %v1390
      %v1443 = vadd.f32 %v1301, %v1393
      %v1444 = vadd.f32 %v1302, %v1398
      %v1445 = vadd.f32 %v1303, %v1401
      %v1446 = vadd.f32 %v1304, %v1406
      %v1447 = vadd.f32 %v1305, %v1409
      %v1448 = vadd.f32 %v1306, %v1414
      %v1449 = vadd.f32 %v1307, %v1417
      %v1450 = vadd.f32 %v1308, %v1422
      %v1451 = vadd.f32 %v1309, %v1425
      %v1452 = vadd.f32 %v1310, %v1430
      %v1453 = vadd.f32 %v1311, %v1433
      %s1454 = scalar_lea.vmem %s1, 14
      %v1455 = vld [vmem:[%s1454] sm:$0x3]
      %vm1456 = vsmask.f32 5376
      %v1457 = vrot.slane %v286, 2
      %v1458 = vrot.slane %v282, 3
      %v1459 = vor.u32 %v1457, %v1458
      %v1460 = vrot.slane %v294, 2
      %v1461 = vrot.slane %v290, 3
      %v1462 = vor.u32 %v1460, %v1461
      %v1463 = vsel %vm1456, %v1459, %v1462
      %v1464 = vrot.slane %v302, 2
      %v1465 = vrot.slane %v298, 3
      %v1466 = vor.u32 %v1464, %v1465
      %v1467 = vsel %vm1456, %v1462, %v1466
      %v1468 = vrot.slane %v310, 2
      %v1469 = vrot.slane %v306, 3
      %v1470 = vor.u32 %v1468, %v1469
      %v1471 = vsel %vm1456, %v1466, %v1470
      %v1472 = vrot.slane %v318, 2
      %v1473 = vrot.slane %v314, 3
      %v1474 = vor.u32 %v1472, %v1473
      %v1475 = vsel %vm1456, %v1470, %v1474
      %v1476 = vrot.slane %v326, 2
      %v1477 = vrot.slane %v322, 3
      %v1478 = vor.u32 %v1476, %v1477
      %v1479 = vsel %vm1456, %v1474, %v1478
      %v1480 = vrot.slane %v334, 2
      %v1481 = vrot.slane %v330, 3
      %v1482 = vor.u32 %v1480, %v1481
      %v1483 = vsel %vm1456, %v1478, %v1482
      %v1484 = vrot.slane %v967, 2
      %v1485 = vrot.slane %v970, 3
      %v1486 = vor.u32 %v1484, %v1485
      %v1487 = vsel %vm1456, %v1482, %v1486
      %v1489 = vshrl.u32 %v1312, 16
      %v1491 = vrot.slane %v1489, 2
      %v1492 = vshll.u32 %v1312, 16
      %v1494 = vrot.slane %v1492, 3
      %v1495 = vor.u32 %v1491, %v1494
      %v1496 = vsel %vm1456, %v1486, %v1495
      %v1498 = vshrl.u32 %v1313, 16
      %v1500 = vrot.slane %v1498, 2
      %v1501 = vshll.u32 %v1313, 16
      %v1503 = vrot.slane %v1501, 3
      %v1504 = vor.u32 %v1500, %v1503
      %v1505 = vsel %vm1456, %v1495, %v1504
      %v1507 = vsel %vm342, %v1463, 0
      %v1510 = vsel %vm342, %v1467, 0
      %v1513 = vsel %vm342, %v1471, 0
      %v1516 = vsel %vm342, %v1475, 0
      %v1519 = vsel %vm342, %v1479, 0
      %v1522 = vsel %vm342, %v1483, 0
      %v1525 = vsel %vm342, %v1487, 0
      %v1528 = vsel %vm342, %v1496, 0
      %v1531 = vsel %vm342, %v1505, 0
      %v1534 = vsel %vm370, %v1455, 0
      %1536 = vmatprep.subr.bf16.mxu0 0
      %1537 = vmatpush1.bf16.msra.mxu0 %v1534
      %1538 = vmatprep.subr.bf16.mxu0 0
      %1539 = vmatpush1.bf16.msra.mxu0 0
      %1540 = vmatprep.subr.bf16.mxu0 0
      %1541 = vmatpush1.bf16.msra.mxu0 0
      %1542 = vmatprep.subr.bf16.mxu0 0
      %1543 = vmatpush1.bf16.msra.mxu0 0
      %1544 = vmatprep.subr.bf16.mxu0 0
      %1545 = vmatpush1.bf16.msra.mxu0 0
      %1546 = vmatprep.subr.bf16.mxu0 0
      %1547 = vmatpush1.bf16.msra.mxu0 0
      %1548 = vmatprep.subr.bf16.mxu0 0
      %1549 = vmatpush1.bf16.msra.mxu0 0
      %1550 = vmatprep.subr.bf16.mxu0 0
      %1551 = vmatpush1.bf16.msra.mxu0 0
      %1552 = vmatprep.subr.bf16.mxu0 0
      %1553 = vmatpush1.bf16.msra.mxu0 0
      %1554 = vmatprep.subr.bf16.mxu0 0
      %1555 = vmatpush1.bf16.msra.mxu0 0
      %1556 = vmatprep.subr.bf16.mxu0 0
      %1557 = vmatpush1.bf16.msra.mxu0 0
      %1558 = vmatprep.subr.bf16.mxu0 0
      %1559 = vmatpush1.bf16.msra.mxu0 0
      %1560 = vmatprep.subr.bf16.mxu0 0
      %1561 = vmatpush1.bf16.msra.mxu0 0
      %1562 = vmatprep.subr.bf16.mxu0 0
      %1563 = vmatpush1.bf16.msra.mxu0 0
      %1564 = vmatprep.subr.bf16.mxu0 0
      %1565 = vmatpush1.bf16.msra.mxu0 0
      %1566 = vmatprep.subr.bf16.mxu0 0
      %1567 = vmatpush1.bf16.msra.mxu0 0
      %1568 = vmatprep.mubr.bf16.mxu0 0
      %1569 = vmatmul.mubr.bf16.gmra.mrb[0].mxu0 %v1507
      %v1570 = vpop.f32.mrb[0].mxu0
      %v1571 = vadd.f32 0.0, %v1570
      %v1572 = vpop.f32.mrb[0].mxu0
      %v1573 = vpop.f32.mrb[0].mxu0
      %v1574 = vadd.f32 0.0, %v1573
      %v1575 = vpop.f32.mrb[0].mxu0
      %1576 = vmatprep.mubr.bf16.mxu0 0
      %1577 = vmatmul.mubr.bf16.gmra.mrb[0].mxu0 %v1510
      %v1578 = vpop.f32.mrb[0].mxu0
      %v1579 = vadd.f32 0.0, %v1578
      %v1580 = vpop.f32.mrb[0].mxu0
      %v1581 = vpop.f32.mrb[0].mxu0
      %v1582 = vadd.f32 0.0, %v1581
      %v1583 = vpop.f32.mrb[0].mxu0
      %1584 = vmatprep.mubr.bf16.mxu0 0
      %1585 = vmatmul.mubr.bf16.gmra.mrb[0].mxu0 %v1513
      %v1586 = vpop.f32.mrb[0].mxu0
      %v1587 = vadd.f32 0.0, %v1586
      %v1588 = vpop.f32.mrb[0].mxu0
      %v1589 = vpop.f32.mrb[0].mxu0
      %v1590 = vadd.f32 0.0, %v1589
      %v1591 = vpop.f32.mrb[0].mxu0
      %1592 = vmatprep.mubr.bf16.mxu0 0
      %1593 = vmatmul.mubr.bf16.gmra.mrb[0].mxu0 %v1516
      %v1594 = vpop.f32.mrb[0].mxu0
      %v1595 = vadd.f32 0.0, %v1594
      %v1596 = vpop.f32.mrb[0].mxu0
      %v1597 = vpop.f32.mrb[0].mxu0
      %v1598 = vadd.f32 0.0, %v1597
      %v1599 = vpop.f32.mrb[0].mxu0
      %1600 = vmatprep.mubr.bf16.mxu0 0
      %1601 = vmatmul.mubr.bf16.gmra.mrb[0].mxu0 %v1519
      %v1602 = vpop.f32.mrb[0].mxu0
      %v1603 = vadd.f32 0.0, %v1602
      %v1604 = vpop.f32.mrb[0].mxu0
      %v1605 = vpop.f32.mrb[0].mxu0
      %v1606 = vadd.f32 0.0, %v1605
      %v1607 = vpop.f32.mrb[0].mxu0
      %1608 = vmatprep.mubr.bf16.mxu0 0
      %1609 = vmatmul.mubr.bf16.gmra.mrb[0].mxu0 %v1522
      %v1610 = vpop.f32.mrb[0].mxu0
      %v1611 = vadd.f32 0.0, %v1610
      %v1612 = vpop.f32.mrb[0].mxu0
      %v1613 = vpop.f32.mrb[0].mxu0
      %v1614 = vadd.f32 0.0, %v1613
      %v1615 = vpop.f32.mrb[0].mxu0
      %1616 = vmatprep.mubr.bf16.mxu0 0
      %1617 = vmatmul.mubr.bf16.gmra.mrb[0].mxu0 %v1525
      %v1618 = vpop.f32.mrb[0].mxu0
      %v1619 = vadd.f32 0.0, %v1618
      %v1620 = vpop.f32.mrb[0].mxu0
      %v1621 = vpop.f32.mrb[0].mxu0
      %v1622 = vadd.f32 0.0, %v1621
      %v1623 = vpop.f32.mrb[0].mxu0
      %1624 = vmatprep.mubr.bf16.mxu0 0
      %1625 = vmatmul.mubr.bf16.gmra.mrb[0].mxu0 %v1528
      %v1626 = vpop.f32.mrb[0].mxu0
      %v1627 = vadd.f32 0.0, %v1626
      %v1628 = vpop.f32.mrb[0].mxu0
      %v1629 = vpop.f32.mrb[0].mxu0
      %v1630 = vadd.f32 0.0, %v1629
      %v1631 = vpop.f32.mrb[0].mxu0
      %1632 = vmatprep.mubr.bf16.mxu0 0
      %1633 = vmatmul.mubr.bf16.gmra.mrb[0].mxu0 %v1531
      %v1634 = vpop.f32.mrb[0].mxu0
      %v1635 = vadd.f32 0.0, %v1634
      %v1636 = vpop.f32.mrb[0].mxu0
      %v1637 = vpop.f32.mrb[0].mxu0
      %v1638 = vadd.f32 0.0, %v1637
      %v1639 = vpop.f32.mrb[0].mxu0
      %1640 = vdwg.mxu0
      %v1641 = vadd.f32 %v1436, %v1571
      %v1642 = vadd.f32 %v1437, %v1574
      %v1643 = vadd.f32 %v1438, %v1579
      %v1644 = vadd.f32 %v1439, %v1582
      %v1645 = vadd.f32 %v1440, %v1587
      %v1646 = vadd.f32 %v1441, %v1590
      %v1647 = vadd.f32 %v1442, %v1595
      %v1648 = vadd.f32 %v1443, %v1598
      %v1649 = vadd.f32 %v1444, %v1603
      %v1650 = vadd.f32 %v1445, %v1606
      %v1651 = vadd.f32 %v1446, %v1611
      %v1652 = vadd.f32 %v1447, %v1614
      %v1653 = vadd.f32 %v1448, %v1619
      %v1654 = vadd.f32 %v1449, %v1622
      %v1655 = vadd.f32 %v1450, %v1627
      %v1656 = vadd.f32 %v1451, %v1630
      %v1657 = vadd.f32 %v1452, %v1635
      %v1658 = vadd.f32 %v1453, %v1638
      %s1659 = scalar_lea.vmem %s1, 16
      %v1660 = vld [vmem:[%s1659] sm:$0x3]
      %vm1661 = vcmask 1044480
      %v1662 = vrot.slane %v254, 3
      %v1663 = vrot.slane %v255, 3
      %v1664 = vsel %vm1661, %v1662, %v1663
      %v1665 = vrot.slane %v256, 3
      %v1666 = vsel %vm1661, %v1663, %v1665
      %v1667 = vrot.slane %v257, 3
      %v1668 = vsel %vm1661, %v1665, %v1667
      %v1669 = vrot.slane %v258, 3
      %v1670 = vsel %vm1661, %v1667, %v1669
      %v1671 = vrot.slane %v259, 3
      %v1672 = vsel %vm1661, %v1669, %v1671
      %v1673 = vrot.slane %v260, 3
      %v1674 = vsel %vm1661, %v1671, %v1673
      %v1675 = vrot.slane %v790, 3
      %v1676 = vsel %vm1661, %v1673, %v1675
      %v1677 = vrot.slane %v1312, 3
      %v1678 = vsel %vm1661, %v1675, %v1677
      %v1679 = vrot.slane %v1313, 3
      %v1680 = vsel %vm1661, %v1677, %v1679
      %v1682 = vsel %vm342, %v1664, 0
      %v1685 = vsel %vm342, %v1666, 0
      %v1688 = vsel %vm342, %v1668, 0
      %v1691 = vsel %vm342, %v1670, 0
      %v1694 = vsel %vm342, %v1672, 0
      %v1697 = vsel %vm342, %v1674, 0
      %v1700 = vsel %vm342, %v1676, 0
      %v1703 = vsel %vm342, %v1678, 0
      %v1706 = vsel %vm342, %v1680, 0
      %v1709 = vsel %vm370, %v1660, 0
      %1711 = vmatprep.subr.bf16.mxu0 0
      %1712 = vmatpush1.bf16.msra.mxu0 %v1709
      %1713 = vmatprep.subr.bf16.mxu0 0
      %1714 = vmatpush1.bf16.msra.mxu0 0
      %1715 = vmatprep.subr.bf16.mxu0 0
      %1716 = vmatpush1.bf16.msra.mxu0 0
      %1717 = vmatprep.subr.bf16.mxu0 0
      %1718 = vmatpush1.bf16.msra.mxu0 0
      %1719 = vmatprep.subr.bf16.mxu0 0
      %1720 = vmatpush1.bf16.msra.mxu0 0
      %1721 = vmatprep.subr.bf16.mxu0 0
      %1722 = vmatpush1.bf16.msra.mxu0 0
      %1723 = vmatprep.subr.bf16.mxu0 0
      %1724 = vmatpush1.bf16.msra.mxu0 0
      %1725 = vmatprep.subr.bf16.mxu0 0
      %1726 = vmatpush1.bf16.msra.mxu0 0
      %1727 = vmatprep.subr.bf16.mxu0 0
      %1728 = vmatpush1.bf16.msra.mxu0 0
      %1729 = vmatprep.subr.bf16.mxu0 0
      %1730 = vmatpush1.bf16.msra.mxu0 0
      %1731 = vmatprep.subr.bf16.mxu0 0
      %1732 = vmatpush1.bf16.msra.mxu0 0
      %1733 = vmatprep.subr.bf16.mxu0 0
      %1734 = vmatpush1.bf16.msra.mxu0 0
      %1735 = vmatprep.subr.bf16.mxu0 0
      %1736 = vmatpush1.bf16.msra.mxu0 0
      %1737 = vmatprep.subr.bf16.mxu0 0
      %1738 = vmatpush1.bf16.msra.mxu0 0
      %1739 = vmatprep.subr.bf16.mxu0 0
      %1740 = vmatpush1.bf16.msra.mxu0 0
      %1741 = vmatprep.subr.bf16.mxu0 0
      %1742 = vmatpush1.bf16.msra.mxu0 0
      %1743 = vmatprep.mubr.bf16.mxu0 0
      %1744 = vmatmul.mubr.bf16.gmra.mrb[0].mxu0 %v1682
      %v1745 = vpop.f32.mrb[0].mxu0
      %v1746 = vadd.f32 0.0, %v1745
      %v1747 = vpop.f32.mrb[0].mxu0
      %v1748 = vpop.f32.mrb[0].mxu0
      %v1749 = vadd.f32 0.0, %v1748
      %v1750 = vpop.f32.mrb[0].mxu0
      %1751 = vmatprep.mubr.bf16.mxu0 0
      %1752 = vmatmul.mubr.bf16.gmra.mrb[0].mxu0 %v1685
      %v1753 = vpop.f32.mrb[0].mxu0
      %v1754 = vadd.f32 0.0, %v1753
      %v1755 = vpop.f32.mrb[0].mxu0
      %v1756 = vpop.f32.mrb[0].mxu0
      %v1757 = vadd.f32 0.0, %v1756
      %v1758 = vpop.f32.mrb[0].mxu0
      %1759 = vmatprep.mubr.bf16.mxu0 0
      %1760 = vmatmul.mubr.bf16.gmra.mrb[0].mxu0 %v1688
      %v1761 = vpop.f32.mrb[0].mxu0
      %v1762 = vadd.f32 0.0, %v1761
      %v1763 = vpop.f32.mrb[0].mxu0
      %v1764 = vpop.f32.mrb[0].mxu0
      %v1765 = vadd.f32 0.0, %v1764
      %v1766 = vpop.f32.mrb[0].mxu0
      %1767 = vmatprep.mubr.bf16.mxu0 0
      %1768 = vmatmul.mubr.bf16.gmra.mrb[0].mxu0 %v1691
      %v1769 = vpop.f32.mrb[0].mxu0
      %v1770 = vadd.f32 0.0, %v1769
      %v1771 = vpop.f32.mrb[0].mxu0
      %v1772 = vpop.f32.mrb[0].mxu0
      %v1773 = vadd.f32 0.0, %v1772
      %v1774 = vpop.f32.mrb[0].mxu0
      %1775 = vmatprep.mubr.bf16.mxu0 0
      %1776 = vmatmul.mubr.bf16.gmra.mrb[0].mxu0 %v1694
      %v1777 = vpop.f32.mrb[0].mxu0
      %v1778 = vadd.f32 0.0, %v1777
      %v1779 = vpop.f32.mrb[0].mxu0
      %v1780 = vpop.f32.mrb[0].mxu0
      %v1781 = vadd.f32 0.0, %v1780
      %v1782 = vpop.f32.mrb[0].mxu0
      %1783 = vmatprep.mubr.bf16.mxu0 0
      %1784 = vmatmul.mubr.bf16.gmra.mrb[0].mxu0 %v1697
      %v1785 = vpop.f32.mrb[0].mxu0
      %v1786 = vadd.f32 0.0, %v1785
      %v1787 = vpop.f32.mrb[0].mxu0
      %v1788 = vpop.f32.mrb[0].mxu0
      %v1789 = vadd.f32 0.0, %v1788
      %v1790 = vpop.f32.mrb[0].mxu0
      %1791 = vmatprep.mubr.bf16.mxu0 0
      %1792 = vmatmul.mubr.bf16.gmra.mrb[0].mxu0 %v1700
      %v1793 = vpop.f32.mrb[0].mxu0
      %v1794 = vadd.f32 0.0, %v1793
      %v1795 = vpop.f32.mrb[0].mxu0
      %v1796 = vpop.f32.mrb[0].mxu0
      %v1797 = vadd.f32 0.0, %v1796
      %v1798 = vpop.f32.mrb[0].mxu0
      %1799 = vmatprep.mubr.bf16.mxu0 0
      %1800 = vmatmul.mubr.bf16.gmra.mrb[0].mxu0 %v1703
      %v1801 = vpop.f32.mrb[0].mxu0
      %v1802 = vadd.f32 0.0, %v1801
      %v1803 = vpop.f32.mrb[0].mxu0
      %v1804 = vpop.f32.mrb[0].mxu0
      %v1805 = vadd.f32 0.0, %v1804
      %v1806 = vpop.f32.mrb[0].mxu0
      %1807 = vmatprep.mubr.bf16.mxu0 0
      %1808 = vmatmul.mubr.bf16.gmra.mrb[0].mxu0 %v1706
      %v1809 = vpop.f32.mrb[0].mxu0
      %v1810 = vadd.f32 0.0, %v1809
      %v1811 = vpop.f32.mrb[0].mxu0
      %v1812 = vpop.f32.mrb[0].mxu0
      %v1813 = vadd.f32 0.0, %v1812
      %v1814 = vpop.f32.mrb[0].mxu0
      %1815 = vdwg.mxu0
      %v1816 = vadd.f32 %v1641, %v1746
      %v1817 = vadd.f32 %v1642, %v1749
      %v1818 = vadd.f32 %v1643, %v1754
      %v1819 = vadd.f32 %v1644, %v1757
      %v1820 = vadd.f32 %v1645, %v1762
      %v1821 = vadd.f32 %v1646, %v1765
      %v1822 = vadd.f32 %v1647, %v1770
      %v1823 = vadd.f32 %v1648, %v1773
      %v1824 = vadd.f32 %v1649, %v1778
      %v1825 = vadd.f32 %v1650, %v1781
      %v1826 = vadd.f32 %v1651, %v1786
      %v1827 = vadd.f32 %v1652, %v1789
      %v1828 = vadd.f32 %v1653, %v1794
      %v1829 = vadd.f32 %v1654, %v1797
      %v1830 = vadd.f32 %v1655, %v1802
      %v1831 = vadd.f32 %v1656, %v1805
      %v1832 = vadd.f32 %v1657, %v1810
      %v1833 = vadd.f32 %v1658, %v1813
      %vm1834 = vcmask 64512
      %1835 = vst.msk [vmem:[%s219] sm:$0xff] %vm1834, %v1816
      %1836 = vst.msk [vmem:[%s219 + $0x8] sm:$0xff] %vm1834, %v1817
      %1837 = vst.msk [vmem:[%s219 + $0x10] sm:$0xff] %vm1834, %v1818
      %1838 = vst.msk [vmem:[%s219 + $0x18] sm:$0xff] %vm1834, %v1819
      %1839 = vst.msk [vmem:[%s219 + $0x20] sm:$0xff] %vm1834, %v1820
      %1840 = vst.msk [vmem:[%s219 + $0x28] sm:$0xff] %vm1834, %v1821
      %1841 = vst.msk [vmem:[%s219 + $0x30] sm:$0xff] %vm1834, %v1822
      %1842 = vst.msk [vmem:[%s219 + $0x38] sm:$0xff] %vm1834, %v1823
      %1843 = vst.msk [vmem:[%s219 + $0x40] sm:$0xff] %vm1834, %v1824
      %1844 = vst.msk [vmem:[%s219 + $0x48] sm:$0xff] %vm1834, %v1825
      %1845 = vst.msk [vmem:[%s219 + $0x50] sm:$0xff] %vm1834, %v1826
      %1846 = vst.msk [vmem:[%s219 + $0x58] sm:$0xff] %vm1834, %v1827
      %1847 = vst.msk [vmem:[%s219 + $0x60] sm:$0xff] %vm1834, %v1828
      %1848 = vst.msk [vmem:[%s219 + $0x68] sm:$0xff] %vm1834, %v1829
      %1849 = vst.msk [vmem:[%s219 + $0x70] sm:$0xff] %vm1834, %v1830
      %1850 = vst.msk [vmem:[%s219 + $0x78] sm:$0xff] %vm1834, %v1831
      %1851 = vst.msk [vmem:[%s219 + $0x80] sm:$0xff] %vm1834, %v1832
      %1852 = vst.msk [vmem:[%s219 + $0x88] sm:$0xff] %vm1834, %v1833
      %v1853 = vlaneseq
      %v1854 = vshrl.u32 %v1853, 7
      %v1855 = vadd.s32 %v1854, 8
      %v1856 = vadd.s32 %v1854, 16
      %v1857 = vadd.s32 %v1854, 24
      %v1858 = vadd.s32 %v1854, 32
      %v1859 = vadd.s32 %v1854, 40
      %v1860 = vadd.s32 %v1854, 48
      %v1861 = vadd.s32 %v1854, 56
      %v1862 = vadd.s32 %v1854, 64
      %v1863 = vadd.s32 %v1854, 72
      %v1864 = vadd.s32 %v1854, 80
      %v1865 = vadd.s32 %v1854, 88
      %v1866 = vadd.s32 %v1854, 96
      %v1867 = vadd.s32 %v1854, 104
      %v1868 = vadd.s32 %v1854, 112
      %v1869 = vadd.s32 %v1854, 120
      %v1870 = vadd.s32 %v1854, 128
      %v1871 = vadd.s32 %v1854, 136
      %vm1872 = vcmp.lt.s32.totalorder %v1854, 0
      %v1873 = vsub.s32 0, %v1854
      %v1874 = vsel %vm1872, %v1873, %v1854
      %v1875 = vmul.u32.u64.compose %v1874, 3817748708
      %v1876 = vextract.low.u32 %v1875
      %v1877 = vextract.high.u32 %v1875
      %v1878 = vshrl.u32 %v1877, 4
      %v1879 = vmul.u32 %v1878, 18
      %v1880 = vsub.s32 %v1874, %v1879
      %v1881 = vsub.s32 0, %v1880
      %v1882 = vsel %vm1872, %v1881, %v1880
      %vm1883 = vcmp.lt.s32.totalorder %v1855, 0
      %v1884 = vsub.s32 0, %v1855
      %v1885 = vsel %vm1883, %v1884, %v1855
      %v1886 = vmul.u32.u64.compose %v1885, 3817748708
      %v1887 = vextract.low.u32 %v1886
      %v1888 = vextract.high.u32 %v1886
      %v1889 = vshrl.u32 %v1888, 4
      %v1890 = vmul.u32 %v1889, 18
      %v1891 = vsub.s32 %v1885, %v1890
      %v1892 = vsub.s32 0, %v1891
      %v1893 = vsel %vm1883, %v1892, %v1891
      %vm1894 = vcmp.lt.s32.totalorder %v1856, 0
      %v1895 = vsub.s32 0, %v1856
      %v1896 = vsel %vm1894, %v1895, %v1856
      %v1897 = vmul.u32.u64.compose %v1896, 3817748708
      %v1898 = vextract.low.u32 %v1897
      %v1899 = vextract.high.u32 %v1897
      %v1900 = vshrl.u32 %v1899, 4
      %v1901 = vmul.u32 %v1900, 18
      %v1902 = vsub.s32 %v1896, %v1901
      %v1903 = vsub.s32 0, %v1902
      %v1904 = vsel %vm1894, %v1903, %v1902
      %vm1905 = vcmp.lt.s32.totalorder %v1857, 0
      %v1906 = vsub.s32 0, %v1857
      %v1907 = vsel %vm1905, %v1906, %v1857
      %v1908 = vmul.u32.u64.compose %v1907, 3817748708
      %v1909 = vextract.low.u32 %v1908
      %v1910 = vextract.high.u32 %v1908
      %v1911 = vshrl.u32 %v1910, 4
      %v1912 = vmul.u32 %v1911, 18
      %v1913 = vsub.s32 %v1907, %v1912
      %v1914 = vsub.s32 0, %v1913
      %v1915 = vsel %vm1905, %v1914, %v1913
      %vm1916 = vcmp.lt.s32.totalorder %v1858, 0
      %v1917 = vsub.s32 0, %v1858
      %v1918 = vsel %vm1916, %v1917, %v1858
      %v1919 = vmul.u32.u64.compose %v1918, 3817748708
      %v1920 = vextract.low.u32 %v1919
      %v1921 = vextract.high.u32 %v1919
      %v1922 = vshrl.u32 %v1921, 4
      %v1923 = vmul.u32 %v1922, 18
      %v1924 = vsub.s32 %v1918, %v1923
      %v1925 = vsub.s32 0, %v1924
      %v1926 = vsel %vm1916, %v1925, %v1924
      %vm1927 = vcmp.lt.s32.totalorder %v1859, 0
      %v1928 = vsub.s32 0, %v1859
      %v1929 = vsel %vm1927, %v1928, %v1859
      %v1930 = vmul.u32.u64.compose %v1929, 3817748708
      %v1931 = vextract.low.u32 %v1930
      %v1932 = vextract.high.u32 %v1930
      %v1933 = vshrl.u32 %v1932, 4
      %v1934 = vmul.u32 %v1933, 18
      %v1935 = vsub.s32 %v1929, %v1934
      %v1936 = vsub.s32 0, %v1935
      %v1937 = vsel %vm1927, %v1936, %v1935
      %vm1938 = vcmp.lt.s32.totalorder %v1860, 0
      %v1939 = vsub.s32 0, %v1860
      %v1940 = vsel %vm1938, %v1939, %v1860
      %v1941 = vmul.u32.u64.compose %v1940, 3817748708
      %v1942 = vextract.low.u32 %v1941
      %v1943 = vextract.high.u32 %v1941
      %v1944 = vshrl.u32 %v1943, 4
      %v1945 = vmul.u32 %v1944, 18
      %v1946 = vsub.s32 %v1940, %v1945
      %v1947 = vsub.s32 0, %v1946
      %v1948 = vsel %vm1938, %v1947, %v1946
      %vm1949 = vcmp.lt.s32.totalorder %v1861, 0
      %v1950 = vsub.s32 0, %v1861
      %v1951 = vsel %vm1949, %v1950, %v1861
      %v1952 = vmul.u32.u64.compose %v1951, 3817748708
      %v1953 = vextract.low.u32 %v1952
      %v1954 = vextract.high.u32 %v1952
      %v1955 = vshrl.u32 %v1954, 4
      %v1956 = vmul.u32 %v1955, 18
      %v1957 = vsub.s32 %v1951, %v1956
      %v1958 = vsub.s32 0, %v1957
      %v1959 = vsel %vm1949, %v1958, %v1957
      %vm1960 = vcmp.lt.s32.totalorder %v1862, 0
      %v1961 = vsub.s32 0, %v1862
      %v1962 = vsel %vm1960, %v1961, %v1862
      %v1963 = vmul.u32.u64.compose %v1962, 3817748708
      %v1964 = vextract.low.u32 %v1963
      %v1965 = vextract.high.u32 %v1963
      %v1966 = vshrl.u32 %v1965, 4
      %v1967 = vmul.u32 %v1966, 18
      %v1968 = vsub.s32 %v1962, %v1967
      %v1969 = vsub.s32 0, %v1968
      %v1970 = vsel %vm1960, %v1969, %v1968
      %vm1971 = vcmp.lt.s32.totalorder %v1863, 0
      %v1972 = vsub.s32 0, %v1863
      %v1973 = vsel %vm1971, %v1972, %v1863
      %v1974 = vmul.u32.u64.compose %v1973, 3817748708
      %v1975 = vextract.low.u32 %v1974
      %v1976 = vextract.high.u32 %v1974
      %v1977 = vshrl.u32 %v1976, 4
      %v1978 = vmul.u32 %v1977, 18
      %v1979 = vsub.s32 %v1973, %v1978
      %v1980 = vsub.s32 0, %v1979
      %v1981 = vsel %vm1971, %v1980, %v1979
      %vm1982 = vcmp.lt.s32.totalorder %v1864, 0
      %v1983 = vsub.s32 0, %v1864
      %v1984 = vsel %vm1982, %v1983, %v1864
      %v1985 = vmul.u32.u64.compose %v1984, 3817748708
      %v1986 = vextract.low.u32 %v1985
      %v1987 = vextract.high.u32 %v1985
      %v1988 = vshrl.u32 %v1987, 4
      %v1989 = vmul.u32 %v1988, 18
      %v1990 = vsub.s32 %v1984, %v1989
      %v1991 = vsub.s32 0, %v1990
      %v1992 = vsel %vm1982, %v1991, %v1990
      %vm1993 = vcmp.lt.s32.totalorder %v1865, 0
      %v1994 = vsub.s32 0, %v1865
      %v1995 = vsel %vm1993, %v1994, %v1865
      %v1996 = vmul.u32.u64.compose %v1995, 3817748708
      %v1997 = vextract.low.u32 %v1996
      %v1998 = vextract.high.u32 %v1996
      %v1999 = vshrl.u32 %v1998, 4
      %v2000 = vmul.u32 %v1999, 18
      %v2001 = vsub.s32 %v1995, %v2000
      %v2002 = vsub.s32 0, %v2001
      %v2003 = vsel %vm1993, %v2002, %v2001
      %vm2004 = vcmp.lt.s32.totalorder %v1866, 0
      %v2005 = vsub.s32 0, %v1866
      %v2006 = vsel %vm2004, %v2005, %v1866
      %v2007 = vmul.u32.u64.compose %v2006, 3817748708
      %v2008 = vextract.low.u32 %v2007
      %v2009 = vextract.high.u32 %v2007
      %v2010 = vshrl.u32 %v2009, 4
      %v2011 = vmul.u32 %v2010, 18
      %v2012 = vsub.s32 %v2006, %v2011
      %v2013 = vsub.s32 0, %v2012
      %v2014 = vsel %vm2004, %v2013, %v2012
      %vm2015 = vcmp.lt.s32.totalorder %v1867, 0
      %v2016 = vsub.s32 0, %v1867
      %v2017 = vsel %vm2015, %v2016, %v1867
      %v2018 = vmul.u32.u64.compose %v2017, 3817748708
      %v2019 = vextract.low.u32 %v2018
      %v2020 = vextract.high.u32 %v2018
      %v2021 = vshrl.u32 %v2020, 4
      %v2022 = vmul.u32 %v2021, 18
      %v2023 = vsub.s32 %v2017, %v2022
      %v2024 = vsub.s32 0, %v2023
      %v2025 = vsel %vm2015, %v2024, %v2023
      %vm2026 = vcmp.lt.s32.totalorder %v1868, 0
      %v2027 = vsub.s32 0, %v1868
      %v2028 = vsel %vm2026, %v2027, %v1868
      %v2029 = vmul.u32.u64.compose %v2028, 3817748708
      %v2030 = vextract.low.u32 %v2029
      %v2031 = vextract.high.u32 %v2029
      %v2032 = vshrl.u32 %v2031, 4
      %v2033 = vmul.u32 %v2032, 18
      %v2034 = vsub.s32 %v2028, %v2033
      %v2035 = vsub.s32 0, %v2034
      %v2036 = vsel %vm2026, %v2035, %v2034
      %vm2037 = vcmp.lt.s32.totalorder %v1869, 0
      %v2038 = vsub.s32 0, %v1869
      %v2039 = vsel %vm2037, %v2038, %v1869
      %v2040 = vmul.u32.u64.compose %v2039, 3817748708
      %v2041 = vextract.low.u32 %v2040
      %v2042 = vextract.high.u32 %v2040
      %v2043 = vshrl.u32 %v2042, 4
      %v2044 = vmul.u32 %v2043, 18
      %v2045 = vsub.s32 %v2039, %v2044
      %v2046 = vsub.s32 0, %v2045
      %v2047 = vsel %vm2037, %v2046, %v2045
      %vm2048 = vcmp.lt.s32.totalorder %v1870, 0
      %v2049 = vsub.s32 0, %v1870
      %v2050 = vsel %vm2048, %v2049, %v1870
      %v2051 = vmul.u32.u64.compose %v2050, 3817748708
      %v2052 = vextract.low.u32 %v2051
      %v2053 = vextract.high.u32 %v2051
      %v2054 = vshrl.u32 %v2053, 4
      %v2055 = vmul.u32 %v2054, 18
      %v2056 = vsub.s32 %v2050, %v2055
      %v2057 = vsub.s32 0, %v2056
      %v2058 = vsel %vm2048, %v2057, %v2056
      %vm2059 = vcmp.lt.s32.totalorder %v1871, 0
      %v2060 = vsub.s32 0, %v1871
      %v2061 = vsel %vm2059, %v2060, %v1871
      %v2062 = vmul.u32.u64.compose %v2061, 3817748708
      %v2063 = vextract.low.u32 %v2062
      %v2064 = vextract.high.u32 %v2062
      %v2065 = vshrl.u32 %v2064, 4
      %v2066 = vmul.u32 %v2065, 18
      %v2067 = vsub.s32 %v2061, %v2066
      %v2068 = vsub.s32 0, %v2067
      %v2069 = vsel %vm2059, %v2068, %v2067
      %vm2070 = vcmp.ne.s32.totalorder %v1882, 0
      %vm2071 = vcmp.ne.s32.totalorder %v1893, 0
      %vm2072 = vcmp.ne.s32.totalorder %v1904, 0
      %vm2073 = vcmp.ne.s32.totalorder %v1915, 0
      %vm2074 = vcmp.ne.s32.totalorder %v1926, 0
      %vm2075 = vcmp.ne.s32.totalorder %v1937, 0
      %vm2076 = vcmp.ne.s32.totalorder %v1948, 0
      %vm2077 = vcmp.ne.s32.totalorder %v1959, 0
      %vm2078 = vcmp.ne.s32.totalorder %v1970, 0
      %vm2079 = vcmp.ne.s32.totalorder %v1981, 0
      %vm2080 = vcmp.ne.s32.totalorder %v1992, 0
      %vm2081 = vcmp.ne.s32.totalorder %v2003, 0
      %vm2082 = vcmp.ne.s32.totalorder %v2014, 0
      %vm2083 = vcmp.ne.s32.totalorder %v2025, 0
      %vm2084 = vcmp.ne.s32.totalorder %v2036, 0
      %vm2085 = vcmp.ne.s32.totalorder %v2047, 0
      %vm2086 = vcmp.ne.s32.totalorder %v2058, 0
      %vm2087 = vcmp.ne.s32.totalorder %v2069, 0
      %vm2088 = vcmp.lt.s32.totalorder %v1882, 0
      %vm2089 = vcmp.lt.s32.totalorder %v1893, 0
      %vm2090 = vcmp.lt.s32.totalorder %v1904, 0
      %vm2091 = vcmp.lt.s32.totalorder %v1915, 0
      %vm2092 = vcmp.lt.s32.totalorder %v1926, 0
      %vm2093 = vcmp.lt.s32.totalorder %v1937, 0
      %vm2094 = vcmp.lt.s32.totalorder %v1948, 0
      %vm2095 = vcmp.lt.s32.totalorder %v1959, 0
      %vm2096 = vcmp.lt.s32.totalorder %v1970, 0
      %vm2097 = vcmp.lt.s32.totalorder %v1981, 0
      %vm2098 = vcmp.lt.s32.totalorder %v1992, 0
      %vm2099 = vcmp.lt.s32.totalorder %v2003, 0
      %vm2100 = vcmp.lt.s32.totalorder %v2014, 0
      %vm2101 = vcmp.lt.s32.totalorder %v2025, 0
      %vm2102 = vcmp.lt.s32.totalorder %v2036, 0
      %vm2103 = vcmp.lt.s32.totalorder %v2047, 0
      %vm2104 = vcmp.lt.s32.totalorder %v2058, 0
      %vm2105 = vcmp.lt.s32.totalorder %v2069, 0
      %vm2106 = vmand %vm2088, %vm2070
      %vm2107 = vmand %vm2089, %vm2071
      %vm2108 = vmand %vm2090, %vm2072
      %vm2109 = vmand %vm2091, %vm2073
      %vm2110 = vmand %vm2092, %vm2074
      %vm2111 = vmand %vm2093, %vm2075
      %vm2112 = vmand %vm2094, %vm2076
      %vm2113 = vmand %vm2095, %vm2077
      %vm2114 = vmand %vm2096, %vm2078
      %vm2115 = vmand %vm2097, %vm2079
      %vm2116 = vmand %vm2098, %vm2080
      %vm2117 = vmand %vm2099, %vm2081
      %vm2118 = vmand %vm2100, %vm2082
      %vm2119 = vmand %vm2101, %vm2083
      %vm2120 = vmand %vm2102, %vm2084
      %vm2121 = vmand %vm2103, %vm2085
      %vm2122 = vmand %vm2104, %vm2086
      %vm2123 = vmand %vm2105, %vm2087
      %v2124 = vadd.s32 %v1882, 18
      %v2125 = vadd.s32 %v1893, 18
      %v2126 = vadd.s32 %v1904, 18
      %v2127 = vadd.s32 %v1915, 18
      %v2128 = vadd.s32 %v1926, 18
      %v2129 = vadd.s32 %v1937, 18
      %v2130 = vadd.s32 %v1948, 18
      %v2131 = vadd.s32 %v1959, 18
      %v2132 = vadd.s32 %v1970, 18
      %v2133 = vadd.s32 %v1981, 18
      %v2134 = vadd.s32 %v1992, 18
      %v2135 = vadd.s32 %v2003, 18
      %v2136 = vadd.s32 %v2014, 18
      %v2137 = vadd.s32 %v2025, 18
      %v2138 = vadd.s32 %v2036, 18
      %v2139 = vadd.s32 %v2047, 18
      %v2140 = vadd.s32 %v2058, 18
      %v2141 = vadd.s32 %v2069, 18
      %v2142 = vsel %vm2106, %v2124, %v1882
      %v2143 = vsel %vm2107, %v2125, %v1893
      %v2144 = vsel %vm2108, %v2126, %v1904
      %v2145 = vsel %vm2109, %v2127, %v1915
      %v2146 = vsel %vm2110, %v2128, %v1926
      %v2147 = vsel %vm2111, %v2129, %v1937
      %v2148 = vsel %vm2112, %v2130, %v1948
      %v2149 = vsel %vm2113, %v2131, %v1959
      %v2150 = vsel %vm2114, %v2132, %v1970
      %v2151 = vsel %vm2115, %v2133, %v1981
      %v2152 = vsel %vm2116, %v2134, %v1992
      %v2153 = vsel %vm2117, %v2135, %v2003
      %v2154 = vsel %vm2118, %v2136, %v2014
      %v2155 = vsel %vm2119, %v2137, %v2025
      %v2156 = vsel %vm2120, %v2138, %v2036
      %v2157 = vsel %vm2121, %v2139, %v2047
      %v2158 = vsel %vm2122, %v2140, %v2058
      %v2159 = vsel %vm2123, %v2141, %v2069
      %vm2160 = vcmp.lt.s32.totalorder %v2142, 16
      %vm2161 = vcmp.lt.s32.totalorder %v2143, 16
      %vm2162 = vcmp.lt.s32.totalorder %v2144, 16
      %vm2163 = vcmp.lt.s32.totalorder %v2145, 16
      %vm2164 = vcmp.lt.s32.totalorder %v2146, 16
      %vm2165 = vcmp.lt.s32.totalorder %v2147, 16
      %vm2166 = vcmp.lt.s32.totalorder %v2148, 16
      %vm2167 = vcmp.lt.s32.totalorder %v2149, 16
      %vm2168 = vcmp.lt.s32.totalorder %v2150, 16
      %vm2169 = vcmp.lt.s32.totalorder %v2151, 16
      %vm2170 = vcmp.lt.s32.totalorder %v2152, 16
      %vm2171 = vcmp.lt.s32.totalorder %v2153, 16
      %vm2172 = vcmp.lt.s32.totalorder %v2154, 16
      %vm2173 = vcmp.lt.s32.totalorder %v2155, 16
      %vm2174 = vcmp.lt.s32.totalorder %v2156, 16
      %vm2175 = vcmp.lt.s32.totalorder %v2157, 16
      %vm2176 = vcmp.lt.s32.totalorder %v2158, 16
      %vm2177 = vcmp.lt.s32.totalorder %v2159, 16
      %v2178 = vsel %vm2160, 1, 0
      %v2179 = vsel %vm2161, 1, 0
      %v2180 = vsel %vm2162, 1, 0
      %v2181 = vsel %vm2163, 1, 0
      %v2182 = vsel %vm2164, 1, 0
      %v2183 = vsel %vm2165, 1, 0
      %v2184 = vsel %vm2166, 1, 0
      %v2185 = vsel %vm2167, 1, 0
      %v2186 = vsel %vm2168, 1, 0
      %v2187 = vsel %vm2169, 1, 0
      %v2188 = vsel %vm2170, 1, 0
      %v2189 = vsel %vm2171, 1, 0
      %v2190 = vsel %vm2172, 1, 0
      %v2191 = vsel %vm2173, 1, 0
      %v2192 = vsel %vm2174, 1, 0
      %v2193 = vsel %vm2175, 1, 0
      %v2194 = vsel %vm2176, 1, 0
      %v2195 = vsel %vm2177, 1, 0
      %vm2196 = vcmp.eq.s32.totalorder %v2178, 1
      %vm2197 = vcmp.eq.s32.totalorder %v2179, 1
      %vm2198 = vcmp.eq.s32.totalorder %v2180, 1
      %vm2199 = vcmp.eq.s32.totalorder %v2181, 1
      %vm2200 = vcmp.eq.s32.totalorder %v2182, 1
      %vm2201 = vcmp.eq.s32.totalorder %v2183, 1
      %vm2202 = vcmp.eq.s32.totalorder %v2184, 1
      %vm2203 = vcmp.eq.s32.totalorder %v2185, 1
      %vm2204 = vcmp.eq.s32.totalorder %v2186, 1
      %vm2205 = vcmp.eq.s32.totalorder %v2187, 1
      %vm2206 = vcmp.eq.s32.totalorder %v2188, 1
      %vm2207 = vcmp.eq.s32.totalorder %v2189, 1
      %vm2208 = vcmp.eq.s32.totalorder %v2190, 1
      %vm2209 = vcmp.eq.s32.totalorder %v2191, 1
      %vm2210 = vcmp.eq.s32.totalorder %v2192, 1
      %vm2211 = vcmp.eq.s32.totalorder %v2193, 1
      %vm2212 = vcmp.eq.s32.totalorder %v2194, 1
      %vm2213 = vcmp.eq.s32.totalorder %v2195, 1
      %v2214 = vsel %vm2196, %v1816, 0.0
      %v2215 = vsel %vm2197, %v1817, 0.0
      %v2216 = vsel %vm2198, %v1818, 0.0
      %v2217 = vsel %vm2199, %v1819, 0.0
      %v2218 = vsel %vm2200, %v1820, 0.0
      %v2219 = vsel %vm2201, %v1821, 0.0
      %v2220 = vsel %vm2202, %v1822, 0.0
      %v2221 = vsel %vm2203, %v1823, 0.0
      %v2222 = vsel %vm2204, %v1824, 0.0
      %v2223 = vsel %vm2205, %v1825, 0.0
      %v2224 = vsel %vm2206, %v1826, 0.0
      %v2225 = vsel %vm2207, %v1827, 0.0
      %v2226 = vsel %vm2208, %v1828, 0.0
      %v2227 = vsel %vm2209, %v1829, 0.0
      %v2228 = vsel %vm2210, %v1830, 0.0
      %v2229 = vsel %vm2211, %v1831, 0.0
      %v2230 = vsel %vm2212, %v1832, 0.0
      %v2231 = vsel %vm2213, %v1833, 0.0
      %v2232 = vsel %vm1834, %v2214, 0.0
      %v2233 = vsel %vm1834, %v2215, 0.0
      %v2234 = vadd.f32 %v2232, %v2233
      %v2235 = vsel %vm1834, %v2216, 0.0
      %v2236 = vadd.f32 %v2234, %v2235
      %v2237 = vsel %vm1834, %v2217, 0.0
      %v2238 = vadd.f32 %v2236, %v2237
      %v2239 = vsel %vm1834, %v2218, 0.0
      %v2240 = vadd.f32 %v2238, %v2239
      %v2241 = vsel %vm1834, %v2219, 0.0
      %v2242 = vadd.f32 %v2240, %v2241
      %v2243 = vsel %vm1834, %v2220, 0.0
      %v2244 = vadd.f32 %v2242, %v2243
      %v2245 = vsel %vm1834, %v2221, 0.0
      %v2246 = vadd.f32 %v2244, %v2245
      %v2247 = vsel %vm1834, %v2222, 0.0
      %v2248 = vadd.f32 %v2246, %v2247
      %v2249 = vsel %vm1834, %v2223, 0.0
      %v2250 = vadd.f32 %v2248, %v2249
      %v2251 = vsel %vm1834, %v2224, 0.0
      %v2252 = vadd.f32 %v2250, %v2251
      %v2253 = vsel %vm1834, %v2225, 0.0
      %v2254 = vadd.f32 %v2252, %v2253
      %v2255 = vsel %vm1834, %v2226, 0.0
      %v2256 = vadd.f32 %v2254, %v2255
      %v2257 = vsel %vm1834, %v2227, 0.0
      %v2258 = vadd.f32 %v2256, %v2257
      %v2259 = vsel %vm1834, %v2228, 0.0
      %v2260 = vadd.f32 %v2258, %v2259
      %v2261 = vsel %vm1834, %v2229, 0.0
      %v2262 = vadd.f32 %v2260, %v2261
      %v2263 = vsel %vm1834, %v2230, 0.0
      %v2264 = vadd.f32 %v2262, %v2263
      %v2265 = vsel %vm1834, %v2231, 0.0
      %v2266 = vadd.f32 %v2264, %v2265
      %v2267 = vrot.slane %v2266, 4
      %v2268 = vadd.f32 %v2266, %v2267
      %v2269 = vrot.slane %v2268, 2
      %v2270 = vadd.f32 %v2268, %v2269
      %v2271 = vrot.slane %v2270, 1
      %v2272 = vadd.f32 %v2270, %v2271
      %v2273 = vmul.f32 %v2214, %v2214
      %v2274 = vmul.f32 %v2215, %v2215
      %v2275 = vmul.f32 %v2216, %v2216
      %v2276 = vmul.f32 %v2217, %v2217
      %v2277 = vmul.f32 %v2218, %v2218
      %v2278 = vmul.f32 %v2219, %v2219
      %v2279 = vmul.f32 %v2220, %v2220
      %v2280 = vmul.f32 %v2221, %v2221
      %v2281 = vmul.f32 %v2222, %v2222
      %v2282 = vmul.f32 %v2223, %v2223
      %v2283 = vmul.f32 %v2224, %v2224
      %v2284 = vmul.f32 %v2225, %v2225
      %v2285 = vmul.f32 %v2226, %v2226
      %v2286 = vmul.f32 %v2227, %v2227
      %v2287 = vmul.f32 %v2228, %v2228
      %v2288 = vmul.f32 %v2229, %v2229
      %v2289 = vmul.f32 %v2230, %v2230
      %v2290 = vmul.f32 %v2231, %v2231
      %v2291 = vsel %vm1834, %v2273, 0.0
      %v2292 = vsel %vm1834, %v2274, 0.0
      %v2293 = vadd.f32 %v2291, %v2292
      %v2294 = vsel %vm1834, %v2275, 0.0
      %v2295 = vadd.f32 %v2293, %v2294
      %v2296 = vsel %vm1834, %v2276, 0.0
      %v2297 = vadd.f32 %v2295, %v2296
      %v2298 = vsel %vm1834, %v2277, 0.0
      %v2299 = vadd.f32 %v2297, %v2298
      %v2300 = vsel %vm1834, %v2278, 0.0
      %v2301 = vadd.f32 %v2299, %v2300
      %v2302 = vsel %vm1834, %v2279, 0.0
      %v2303 = vadd.f32 %v2301, %v2302
      %v2304 = vsel %vm1834, %v2280, 0.0
      %v2305 = vadd.f32 %v2303, %v2304
      %v2306 = vsel %vm1834, %v2281, 0.0
      %v2307 = vadd.f32 %v2305, %v2306
      %v2308 = vsel %vm1834, %v2282, 0.0
      %v2309 = vadd.f32 %v2307, %v2308
      %v2310 = vsel %vm1834, %v2283, 0.0
      %v2311 = vadd.f32 %v2309, %v2310
      %v2312 = vsel %vm1834, %v2284, 0.0
      %v2313 = vadd.f32 %v2311, %v2312
      %v2314 = vsel %vm1834, %v2285, 0.0
      %v2315 = vadd.f32 %v2313, %v2314
      %v2316 = vsel %vm1834, %v2286, 0.0
      %v2317 = vadd.f32 %v2315, %v2316
      %v2318 = vsel %vm1834, %v2287, 0.0
      %v2319 = vadd.f32 %v2317, %v2318
      %v2320 = vsel %vm1834, %v2288, 0.0
      %v2321 = vadd.f32 %v2319, %v2320
      %v2322 = vsel %vm1834, %v2289, 0.0
      %v2323 = vadd.f32 %v2321, %v2322
      %v2324 = vsel %vm1834, %v2290, 0.0
      %v2325 = vadd.f32 %v2323, %v2324
      %v2326 = vrot.slane %v2325, 4
      %v2327 = vadd.f32 %v2325, %v2326
      %v2328 = vrot.slane %v2327, 2
      %v2329 = vadd.f32 %v2327, %v2328
      %v2330 = vrot.slane %v2329, 1
      %v2331 = vadd.f32 %v2329, %v2330
      %vm2332 = vcmask 1040384
      %v2333 = vsel %vm2332, %v2272, %v2331
      %vm2334 = vcmask 58368
      %2335 = vst.msk [vmem:[%s227] sm:$0x3] %vm2334, %v2333
      %p2336 = scmp.lt.s32.totalorder %s19, 1
      %s2337 = scalar_select %p2336, %s19, 1
      %p2338 = scmp.lt.s32.totalorder %s20, 1
      %s2339 = scalar_select %p2338, %s20, 1
      %s2340 = smul.addr %s2339, 18
      %s2341 = smul.addr %s2337, 36
      %s2342 = sadd.s32 %s2340, %s2341
      %s2343 = smul.addr %s2342, 8
      %s2344 = scalar_lea.vmem %s2, %s2343
      %p2345 = scmp.lt.s32.totalorder %s19, 1
      %s2346 = scalar_select %p2345, %s19, 1
      %p2347 = scmp.lt.s32.totalorder %s20, 1
      %s2348 = scalar_select %p2347, %s20, 1
      %s2349 = smul.addr %s2346, 2
      %s2350 = sadd.s32 %s2348, %s2349
      %s2351 = smul.addr %s2350, 2
      %s2352 = scalar_lea.vmem %s3, %s2351
      // Predicated region
      $region29: #{generator_conv_block.2} parent=27 // pred_check
        %p2353 = pneg %p96
      $region30: #{generator_conv_block.2} parent=27 // pred_check_branch
        %2355 = sbr.rel (%p2353) target = $region32
      $region31: #{generator_conv_block.2} parent=27 // pred_region
        _
      $region32: #{generator_conv_block.2} parent=27 // pred_fallthru
        _
      // Predicated region
      $region33: #{generator_conv_block.2} parent=27 // pred_check
        %p2356 = pneg %p124
      $region34: #{generator_conv_block.2} parent=27 // pred_check_branch
        %2358 = sbr.rel (%p2356) target = $region36
      $region35: #{generator_conv_block.2} parent=27 // pred_region
        _
      $region36: #{generator_conv_block.2} parent=27 // pred_fallthru
        _
    $region28: #{generator_conv_block.2} parent=5 // pred_fallthru
      _
    %p2359 = scmp.le.s32.totalorder 2, %s10
    // Predicated region
    $region37: #{generator_conv_block.2} parent=5 // pred_check
      %p2360 = pneg %p2359
    $region38: #{generator_conv_block.2} parent=5 // pred_check_branch
      %2362 = sbr.rel (%p2360) target = $region40
    $region39: #{generator_conv_block.2} parent=5 // pred_region
      %s2363 = ssub.s32 %s10, 2
      // Predicated region
      $region41: #{generator_conv_block.2} parent=39 // pred_check
        %p2364 = pneg %p102
      $region42: #{generator_conv_block.2} parent=39 // pred_check_branch
        %2366 = sbr.rel (%p2364) target = $region44
      $region43: #{generator_conv_block.2} parent=39 // pred_region
        %p2367 = scmp.lt.s32.totalorder %s21, 1
        %s2368 = scalar_select %p2367, %s21, 1
        %p2369 = scmp.lt.s32.totalorder %s22, 1
        %s2370 = scalar_select %p2369, %s22, 1
        %s2371 = smul.addr %s2370, 18
        %s2372 = smul.addr %s2368, 36
        %s2373 = sadd.s32 %s2371, %s2372
        %s2374 = smul.addr %s2373, 8
        %s2375 = scalar_lea.vmem %s2, %s2374
      $region44: #{generator_conv_block.2} parent=39 // pred_fallthru
        _
      // Predicated region
      $region45: #{generator_conv_block.2} parent=39 // pred_check
        %p2376 = pneg %p130
      $region46: #{generator_conv_block.2} parent=39 // pred_check_branch
        %2378 = sbr.rel (%p2376) target = $region48
      $region47: #{generator_conv_block.2} parent=39 // pred_region
        %p2379 = scmp.lt.s32.totalorder %s21, 1
        %s2380 = scalar_select %p2379, %s21, 1
        %p2381 = scmp.lt.s32.totalorder %s22, 1
        %s2382 = scalar_select %p2381, %s22, 1
        %s2383 = smul.addr %s2380, 2
        %s2384 = sadd.s32 %s2382, %s2383
        %s2385 = smul.addr %s2384, 2
        %s2386 = scalar_lea.vmem %s3, %s2385
      $region48: #{generator_conv_block.2} parent=39 // pred_fallthru
        _
    $region40: #{generator_conv_block.2} parent=5 // pred_fallthru
      _
  $region6: #{generator_conv_block.2} parent=0 // loop_footer
    %s14 = sadd.s32 1, %s10
  $region7: #{generator_conv_block.2} parent=0 // loop_footer_branch
    %9 = sbr.rel target = $region3
  $region8: #{generator_conv_block.2} parent=0 // loop_exit
    _

</llo_original>
